<compile_context>
chip_gen: v6e
topology: v6e:2x2x1
jax: 0.10.0
libtpu: 0.0.40
codegen_flags: <defaults>
</compile_context>

<pallas_src>
import jax
import jax.numpy as jnp
from jax.experimental import pallas as pl
from jax.experimental.pallas import tpu as pltpu


def _round_up(x, m):
    return ((x + m - 1) // m) * m


# ----------------------------------------------------------------------------
# Kernel 1: fused (all metapaths) scale_fc + rotational encoding + intra attn
# ----------------------------------------------------------------------------
def _mpath_kernel(len_ref, node_ref, edge_ref, swbd_ref, sb_ref,
                  aw_ref, ab_ref, ctx_ref, out_ref):
    # len_ref : SMEM (P,) int32        true number of positions per metapath
    # node_ref: (1, TM, Lmax*H) bf16   gathered node embeddings, position-major lanes
    # edge_ref: (1, Emax, TM, Hh) f32  gathered edge embeddings
    # swbd_ref: (1, Lmax*H, Lmax*H) bf16  block-diagonal per-position scale_fc W
    # sb_ref  : (1, 1, Lmax*H) f32     concatenated per-position scale_fc biases
    # aw_ref  : (2H, 2H) bf16          attn_fc weight (in, out)
    # ab_ref  : (1, 2H) f32            attn_fc bias
    # ctx_ref : (1, 2H) f32            intra attention context
    # out_ref : (1, TM, 2H) f32        relu(attention-pooled hidden)
    _, TM, LH = node_ref.shape
    _, Emax, _, Hh = edge_ref.shape
    H = 2 * Hh
    Lmax = LH // H
    H2 = 2 * H
    p = pl.program_id(0)
    plen = len_ref[p]                                    # this path's true length

    # ---- 1) scale_fc for ALL positions: one block-diagonal MXU matmul ----
    y = jnp.dot(node_ref[0], swbd_ref[0],
                preferred_element_type=jnp.float32) + sb_ref[0]       # (TM, Lmax*H)

    # split each position into real/imag halves exactly once
    in_r = [y[:, j * H: j * H + Hh] for j in range(Lmax)]
    in_i = [y[:, j * H + Hh: (j + 1) * H] for j in range(Lmax)]

    # ---- 2) rotational encoding: separate r/i carries, pure VPU FMAs ----
    # (padded edges are zero -> cos=1, sin=0 and only ever touch padded
    #  positions, which are masked out of the attention below)
    edges = edge_ref[0]                                               # (Emax, TM, Hh)
    hr = list(in_r)
    hi = list(in_i)
    for i in reversed(range(Emax)):
        e = edges[i]
        er = jnp.cos(e)
        ei = jnp.sin(e)
        for j in range(i + 1, Lmax):
            r, im = hr[j], hi[j]
            hr[j] = in_r[i] + er * r - ei * im
            hi[j] = in_i[i] + ei * r + er * im
    # path-length scaling folded into constant multiplies; one concat / position
    h = [jnp.concatenate([hr[j], hi[j]], axis=1) * (1.0 / (j + 1))
         for j in range(Lmax)]

    # ---- 3) intra attention (LstmAttn with use_rnn=False) ----
    h0 = h[0]
    feats_list = [jnp.concatenate([h0, h[j]], axis=1) for j in range(1, Lmax)]
    feats = jnp.concatenate(feats_list, axis=0)                       # ((Lmax-1)*TM, 2H)
    act = jnp.tanh(jnp.dot(feats.astype(jnp.bfloat16), aw_ref[...],
                           preferred_element_type=jnp.float32) + ab_ref[...])
    s = jnp.sum(act * ctx_ref[...], axis=1, keepdims=True)            # ((Lmax-1)*TM, 1)

    # per-position scores; positions past this path's true length get -1e30
    scores = []
    for j in range(1, Lmax):
        sj = s[(j - 1) * TM: j * TM]                                  # (TM, 1)
        valid = (j < plen).astype(jnp.float32)                        # scalar 0/1
        scores.append(sj * valid + (valid - 1.0) * 1e30)
    m = scores[0]
    for sj in scores[1:]:
        m = jnp.maximum(m, sj)
    exps = [jnp.exp(sj - m) for sj in scores]
    denom = exps[0]
    for e_ in exps[1:]:
        denom = denom + e_
    inv = pl.reciprocal(denom, approx=True)                           # EUP, off-VALU
    acc = feats_list[0] * (exps[0] * inv)
    for f, e_ in zip(feats_list[1:], exps[1:]):
        acc = acc + f * (e_ * inv)
    # TODO(synk): out lane width is 2H=64 (<128) -> masked stores; only worth
    # packing two rows per 128-lane store once M becomes large.
    out_ref[0] = jnp.maximum(acc, 0.0)                                # relu


def fused_mpath_attention(lens, node_cat, edge_all, sw_bd, sb_cat,
                          attn_w, attn_b, intra_ctx, tm=128):
    """All metapaths in one pallas_call.

    lens     : (P,) int32      true path lengths
    node_cat : (P, MP, Lmax*H) position-major node inputs (zero padded)
    edge_all : (P, Emax, MP, Hh) edge inputs (zero padded)
    sw_bd    : (P, Lmax*H, Lmax*H) block-diagonal scale_fc weights
    sb_cat   : (P, 1, Lmax*H)  concatenated scale_fc biases
    """
    P, MP, LH = node_cat.shape
    Emax, Hh = edge_all.shape[1], edge_all.shape[3]
    H2 = attn_w.shape[0]
    tm_eff = min(tm, MP)
    assert MP % tm_eff == 0
    mm_dtype = jnp.bfloat16            # MXU feeding dtype; accumulation is f32
    return pl.pallas_call(
        _mpath_kernel,
        out_shape=jax.ShapeDtypeStruct((P, MP, H2), jnp.float32),
        grid_spec=pltpu.PrefetchScalarGridSpec(
            num_scalar_prefetch=1,
            grid=(P, MP // tm_eff),
            in_specs=[
                pl.BlockSpec((1, tm_eff, LH), lambda p, m, lens: (p, m, 0)),
                pl.BlockSpec((1, Emax, tm_eff, Hh), lambda p, m, lens: (p, 0, m, 0)),
                pl.BlockSpec((1, LH, LH), lambda p, m, lens: (p, 0, 0)),
                pl.BlockSpec((1, 1, LH), lambda p, m, lens: (p, 0, 0)),
                pl.BlockSpec((H2, H2), lambda p, m, lens: (0, 0)),
                pl.BlockSpec((1, H2), lambda p, m, lens: (0, 0)),
                pl.BlockSpec((1, H2), lambda p, m, lens: (0, 0)),
            ],
            out_specs=pl.BlockSpec((1, tm_eff, H2), lambda p, m, lens: (p, m, 0)),
        ),
        compiler_params=pltpu.CompilerParams(
            dimension_semantics=("parallel", "parallel")),
    )(lens, node_cat.astype(mm_dtype), edge_all, sw_bd.astype(mm_dtype), sb_cat,
      attn_w.astype(mm_dtype), attn_b.reshape(1, H2), intra_ctx.reshape(1, H2))


# ----------------------------------------------------------------------------
# Kernel 2: inter-metapath attention + output projection (vectorized)
# ----------------------------------------------------------------------------
def _inter_kernel(h_ref, wi_ref, bi_ref, ctx_ref, wo_ref, bo_ref, out_ref):
    # h_ref: (B, P, 2H) f32, wi_ref: (2H, 2H) bf16, bi_ref: (1, 2H) f32,
    # ctx_ref: (1, 2H) f32, wo_ref: (2H, H) f32, bo_ref: (1, H) f32,
    # out_ref: (B, H) f32
    B, P, H2 = h_ref.shape
    # ONE inter_fc matmul over all B*P rows
    h_all = jnp.concatenate([h_ref[b] for b in range(B)], axis=0)     # (B*P, 2H)
    act = jnp.tanh(jnp.dot(h_all.astype(jnp.bfloat16), wi_ref[...],
                           preferred_element_type=jnp.float32) + bi_ref[...])
    # mean of the activations over the batch dimension
    mean_act = act[0:P]
    for b in range(1, B):
        mean_act = mean_act + act[b * P:(b + 1) * P]
    mean_act = mean_act * (1.0 / B)                                   # (P, 2H)
    scores = jnp.sum(mean_act * ctx_ref[...], axis=1, keepdims=True)  # (P, 1)
    # weighted sum over metapaths: broadcast multiply + reduce over P
    pooled = jnp.sum(h_ref[...] * scores[None, :, :], axis=1)         # (B, 2H)
    # final projection kept in f32 (tiny; preserves output precision)
    out_ref[...] = (jnp.dot(pooled, wo_ref[...],
                            preferred_element_type=jnp.float32) + bo_ref[...])


def inter_aggregate(hidden, inter_w, inter_b, inter_ctx, out_w, out_b):
    B, P, H2 = hidden.shape
    H = out_w.shape[1]
    return pl.pallas_call(
        _inter_kernel,
        out_shape=jax.ShapeDtypeStruct((B, H), jnp.float32),
    )(hidden, inter_w.astype(jnp.bfloat16), inter_b.reshape(1, H2),
      inter_ctx.reshape(1, H2), out_w, out_b.reshape(1, H))


# ----------------------------------------------------------------------------
# Full forward (glue in plain JAX, hot path in Pallas)
# ----------------------------------------------------------------------------
def metapath_aggr_forward(params, tokens, edge_tokens, schemas, tm=128):
    H = params['out_w'].shape[1]
    Hh = H // 2
    P = len(tokens)
    Ls = [tok.shape[2] for tok in tokens]
    Ms = [tok.shape[0] * tok.shape[1] for tok in tokens]
    Lmax = max(Ls)
    Emax = Lmax - 1
    # default row tile is 128; clamp to the (8-aligned) real row count so tiny
    # problems do not pay for padding rows, while the metapath axis still
    # provides >=2 parallel grid blocks.
    tm_eff = min(tm, _round_up(max(Ms), 8))
    MP = _round_up(max(Ms), tm_eff)

    node_cat = jnp.zeros((P, MP, Lmax * H), jnp.float32)
    edge_all = jnp.zeros((P, Emax, MP, Hh), jnp.float32)
    sw_bd = jnp.zeros((P, Lmax * H, Lmax * H), jnp.float32)
    sb_cat = jnp.zeros((P, 1, Lmax * H), jnp.float32)
    for p, (tok, etok, schema) in enumerate(zip(tokens, edge_tokens, schemas)):
        d0, B, L = tok.shape
        E = L - 1
        M = d0 * B
        tok_f = tok.reshape(M, L)
        etok_f = etok.reshape(M, E)
        node_types = [schema[0][0]] + [schema[j][2] for j in range(E)]
        # embedding gathers (glue)
        nemb = jnp.stack([params['node_emb'][nt][tok_f[:, j]]
                          for j, nt in enumerate(node_types)], axis=1)  # (M, L, H)
        node_cat = node_cat.at[p, :M, :L * H].set(nemb.reshape(M, L * H))
        eemb = jnp.stack([params['edge_emb'][etok_f[:, j]] for j in range(E)],
                         axis=0)                                        # (E, M, Hh)
        edge_all = edge_all.at[p, :E, :M, :].set(eemb)
        # block-diagonal per-position scale_fc weights / biases
        for j, nt in enumerate(node_types):
            sw_bd = sw_bd.at[p, j * H:(j + 1) * H, j * H:(j + 1) * H].set(
                params['scale_w'][nt])
            sb_cat = sb_cat.at[p, 0, j * H:(j + 1) * H].set(params['scale_b'][nt])
    lens = jnp.asarray(Ls, dtype=jnp.int32)

    out = fused_mpath_attention(lens, node_cat, edge_all, sw_bd, sb_cat,
                                params['attn_w'], params['attn_b'],
                                params['intra_ctx'], tm=tm_eff)         # (P, MP, 2H)

    per_path = []
    for p, tok in enumerate(tokens):
        d0, B, L = tok.shape
        M = d0 * B
        per_path.append(out[p, :M].reshape(d0, B, 2 * H).sum(axis=0))   # (B, 2H)
    hidden = jnp.stack(per_path, axis=1)                                # (B, P, 2H)
    return inter_aggregate(hidden, params['inter_w'], params['inter_b'],
                           params['inter_ctx'], params['out_w'], params['out_b'])


# ----------------------------------------------------------------------------
# Pure-JAX reference (for verification)
# ----------------------------------------------------------------------------
def reference_forward(params, tokens, edge_tokens, schemas):
    H = params['out_w'].shape[1]
    Hh = H // 2
    per_path = []
    for tok, etok, schema in zip(tokens, edge_tokens, schemas):
        d0, B, L = tok.shape
        E = L - 1
        M = d0 * B
        tok_f = tok.reshape(M, L)
        etok_f = etok.reshape(M, E)
        node_types = [schema[0][0]] + [schema[j][2] for j in range(E)]
        inputs = jnp.stack(
            [params['node_emb'][nt][tok_f[:, j]] @ params['scale_w'][nt]
             + params['scale_b'][nt]
             for j, nt in enumerate(node_types)], axis=1)          # (M, L, H)
        edge_inputs = jnp.stack(
            [params['edge_emb'][etok_f[:, j]] for j in range(E)], axis=1)
        hidden = inputs
        for i in reversed(range(E)):
            hr, hi = hidden[:, i + 1:, :Hh], hidden[:, i + 1:, Hh:]
            ir = inputs[:, i, :Hh][:, None, :]
            ii = inputs[:, i, Hh:][:, None, :]
            er = jnp.cos(edge_inputs[:, i, :])[:, None, :]
            ei = jnp.sin(edge_inputs[:, i, :])[:, None, :]
            out_r = ir + er * hr - ei * hi
            out_i = ii + ei * hr + er * hi
            hidden = hidden.at[:, i + 1:, :].set(
                jnp.concatenate([out_r, out_i], axis=2))
        hidden = hidden / (1.0 + jnp.arange(L, dtype=jnp.float32))[None, :, None]
        feats = jnp.concatenate(
            [jnp.repeat(hidden[:, :1, :], L - 1, axis=1), hidden[:, 1:, :]],
            axis=2)                                                # (M, L-1, 2H)
        act = jnp.tanh(feats @ params['attn_w'] + params['attn_b'])
        scores = jnp.einsum('mld,d->ml', act, params['intra_ctx'])
        w = jax.nn.softmax(scores, axis=1)
        h = jnp.maximum(jnp.sum(feats * w[:, :, None], axis=1), 0.0)
        per_path.append(h.reshape(d0, B, 2 * H).sum(axis=0))
    hidden = jnp.stack(per_path, axis=1)                           # (B, P, 2H)
    act = jnp.tanh(hidden @ params['inter_w'] + params['inter_b'])
    mean_act = jnp.mean(act, axis=0)                               # (P, 2H)
    scores = mean_act @ params['inter_ctx']                        # (P,)
    out = jnp.sum(hidden * scores[None, :, None], axis=1)          # (B, 2H)
    return out @ params['out_w'] + params['out_b']


# ----------------------------------------------------------------------------
# Deterministic parameter init (shapes per the module __init__)
# ----------------------------------------------------------------------------
def init_params(key, node_vocab, edge_vocab, H, gdel):
    emb_range = gdel / H
    H2 = 2 * H
    b1 = 1.0 / (H ** 0.5)
    b2 = 1.0 / (H2 ** 0.5)
    keys = iter(jax.random.split(key, 4 * len(node_vocab) + 12))
    p = {'node_emb': {}, 'scale_w': {}, 'scale_b': {}}
    for nt, n in sorted(node_vocab.items()):
        p['node_emb'][nt] = jax.random.uniform(next(keys), (n, H), jnp.float32,
                                               -emb_range, emb_range)
        p['scale_w'][nt] = jax.random.uniform(next(keys), (H, H), jnp.float32,
                                              -b1, b1)
        p['scale_b'][nt] = jax.random.uniform(next(keys), (H,), jnp.float32,
                                              -b1, b1)
    p['edge_emb'] = jax.random.uniform(next(keys), (edge_vocab, H // 2),
                                       jnp.float32, -emb_range, emb_range)
    p['attn_w'] = jax.random.uniform(next(keys), (H2, H2), jnp.float32, -b2, b2)
    p['attn_b'] = jax.random.uniform(next(keys), (H2,), jnp.float32, -b2, b2)
    p['intra_ctx'] = jax.random.uniform(next(keys), (H2,), jnp.float32, 0.0, 1.0)
    p['inter_w'] = jax.random.uniform(next(keys), (H2, H2), jnp.float32, -b2, b2)
    p['inter_b'] = jax.random.uniform(next(keys), (H2,), jnp.float32, -b2, b2)
    p['inter_ctx'] = jax.random.uniform(next(keys), (H2,), jnp.float32, 0.0, 1.0)
    p['out_w'] = jax.random.uniform(next(keys), (H2, H), jnp.float32, -b2, b2)
    p['out_b'] = jax.random.uniform(next(keys), (H,), jnp.float32, -b2, b2)
    return p


if __name__ == "__main__":
    HIDDEN = 32
    GDEL = 14.0
    node_vocab = {'a': 20, 'b': 24, 'c': 16}
    edge_vocab = 10
    # TODO(synk): LstmAttn's nn.LSTM (and Dropout) are never active in this
    # forward (use_rnn=False, eval mode), so they are intentionally omitted.
    schemas = [
        [('a', 'r1', 'b'), ('b', 'r2', 'c'), ('c', 'r3', 'a')],   # path length 4
        [('a', 'r1', 'c'), ('c', 'r2', 'b')],                     # path length 3
    ]

    key = jax.random.PRNGKey(0)
    pkey, k1, k2, k3, k4 = jax.random.split(key, 5)
    params = init_params(pkey, node_vocab, edge_vocab, HIDDEN, GDEL)

    d0, B = 2, 4   # neighbours-per-target, batch
    min_vocab = min(node_vocab.values())
    tokens = [
        jax.random.randint(k1, (d0, B, 4), 0, min_vocab, dtype=jnp.int32),
        jax.random.randint(k2, (d0, B, 3), 0, min_vocab, dtype=jnp.int32),
    ]
    edge_tokens = [
        jax.random.randint(k3, (d0, B, 3), 0, edge_vocab, dtype=jnp.int32),
        jax.random.randint(k4, (d0, B, 2), 0, edge_vocab, dtype=jnp.int32),
    ]

    out = metapath_aggr_forward(params, tokens, edge_tokens, schemas)
    out = jax.block_until_ready(out)
    assert out.shape == (B, HIDDEN), out.shape

    ref = jax.block_until_ready(
        reference_forward(params, tokens, edge_tokens, schemas))
    if not bool(jnp.allclose(out, ref, rtol=5e-2, atol=5e-2)):
        raise AssertionError(
            f"mismatch vs reference, max abs diff = {float(jnp.max(jnp.abs(out - ref)))}")

    print("KERNEL_OK")
</pallas_src>

<mosaic_0001>
module attributes {stable_mosaic.version = 11 : i64} {
  func.func @_mpath_kernel(%arg0: i32, %arg1: i32, %arg2: memref<2xi32, #tpu.memory_space<smem>>, %arg3: memref<1x8x128xbf16, #tpu.memory_space<vmem>>, %arg4: memref<1x3x8x16xf32, #tpu.memory_space<vmem>>, %arg5: memref<1x128x128xbf16, #tpu.memory_space<vmem>>, %arg6: memref<1x1x128xf32, #tpu.memory_space<vmem>>, %arg7: memref<64x64xbf16, #tpu.memory_space<vmem>>, %arg8: memref<1x64xf32, #tpu.memory_space<vmem>>, %arg9: memref<1x64xf32, #tpu.memory_space<vmem>>, %arg10: memref<1x8x64xf32, #tpu.memory_space<vmem>>) attributes {dimension_semantics = [#tpu.dimension_semantics<parallel>, #tpu.dimension_semantics<parallel>], iteration_bounds = array<i64: 2, 1>, scalar_prefetch = 1 : i64, scratch_operands = 0 : i64, tpu.core_type = #tpu.core_type<tc>, window_params = [{transform_indices = @transform_0, window_bounds = array<i64: 1, 8, 128>}, {transform_indices = @transform_1, window_bounds = array<i64: 1, 3, 8, 16>}, {transform_indices = @transform_2, window_bounds = array<i64: 1, 128, 128>}, {transform_indices = @transform_3, window_bounds = array<i64: 1, 1, 128>}, {pipeline_mode = #tpu.pipeline_mode<synchronous>, transform_indices = @transform_4, window_bounds = array<i64: 64, 64>}, {pipeline_mode = #tpu.pipeline_mode<synchronous>, transform_indices = @transform_5, window_bounds = array<i64: 1, 64>}, {pipeline_mode = #tpu.pipeline_mode<synchronous>, transform_indices = @transform_6, window_bounds = array<i64: 1, 64>}, {transform_indices = @transform_7, window_bounds = array<i64: 1, 8, 64>}]} {
    %0 = arith.index_cast %arg0 : i32 to index
    %1 = memref.load %arg2[%0] : memref<2xi32, #tpu.memory_space<smem>>
    %c0 = arith.constant 0 : index
    %c0_0 = arith.constant 0 : index
    %c0_1 = arith.constant 0 : index
    %2 = vector.load %arg3[%c0, %c0_0, %c0_1] : memref<1x8x128xbf16, #tpu.memory_space<vmem>>, vector<1x8x128xbf16>
    %3 = vector.shape_cast %2 : vector<1x8x128xbf16> to vector<8x128xbf16>
    %c0_2 = arith.constant 0 : index
    %c0_3 = arith.constant 0 : index
    %c0_4 = arith.constant 0 : index
    %4 = vector.load %arg5[%c0_2, %c0_3, %c0_4] : memref<1x128x128xbf16, #tpu.memory_space<vmem>>, vector<1x128x128xbf16>
    %5 = vector.shape_cast %4 : vector<1x128x128xbf16> to vector<128x128xbf16>
    %cst = arith.constant dense<0.000000e+00> : vector<8x128xf32>
    %6 = tpu.matmul %3, %5, %cst {dimension_numbers = #tpu.dot_dimension_numbers<[1], [0], [0], [1], [0, 0, 1, 1], [], []>} : vector<8x128xbf16>, vector<128x128xbf16>, vector<8x128xf32> -> vector<8x128xf32>
    %c0_5 = arith.constant 0 : index
    %c0_6 = arith.constant 0 : index
    %c0_7 = arith.constant 0 : index
    %7 = vector.load %arg6[%c0_5, %c0_6, %c0_7] : memref<1x1x128xf32, #tpu.memory_space<vmem>>, vector<1x1x128xf32>
    %8 = vector.shape_cast %7 : vector<1x1x128xf32> to vector<1x128xf32>
    %9 = vector.broadcast %8 : vector<1x128xf32> to vector<8x128xf32>
    %10 = arith.addf %6, %9 : vector<8x128xf32>
    %11 = vector.extract_strided_slice %10 {offsets = [0, 0], sizes = [8, 16], strides = [1, 1]} : vector<8x128xf32> to vector<8x16xf32>
    %12 = vector.extract_strided_slice %10 {offsets = [0, 32], sizes = [8, 16], strides = [1, 1]} : vector<8x128xf32> to vector<8x16xf32>
    %13 = vector.extract_strided_slice %10 {offsets = [0, 64], sizes = [8, 16], strides = [1, 1]} : vector<8x128xf32> to vector<8x16xf32>
    %14 = vector.extract_strided_slice %10 {offsets = [0, 96], sizes = [8, 16], strides = [1, 1]} : vector<8x128xf32> to vector<8x16xf32>
    %15 = vector.extract_strided_slice %10 {offsets = [0, 16], sizes = [8, 16], strides = [1, 1]} : vector<8x128xf32> to vector<8x16xf32>
    %16 = vector.extract_strided_slice %10 {offsets = [0, 48], sizes = [8, 16], strides = [1, 1]} : vector<8x128xf32> to vector<8x16xf32>
    %17 = vector.extract_strided_slice %10 {offsets = [0, 80], sizes = [8, 16], strides = [1, 1]} : vector<8x128xf32> to vector<8x16xf32>
    %18 = vector.extract_strided_slice %10 {offsets = [0, 112], sizes = [8, 16], strides = [1, 1]} : vector<8x128xf32> to vector<8x16xf32>
    %c0_8 = arith.constant 0 : index
    %c0_9 = arith.constant 0 : index
    %c0_10 = arith.constant 0 : index
    %c0_11 = arith.constant 0 : index
    %19 = vector.load %arg4[%c0_8, %c0_9, %c0_10, %c0_11] : memref<1x3x8x16xf32, #tpu.memory_space<vmem>>, vector<1x3x8x16xf32>
    %20 = vector.shape_cast %19 : vector<1x3x8x16xf32> to vector<3x8x16xf32>
    %21 = vector.extract_strided_slice %20 {offsets = [2, 0, 0], sizes = [1, 8, 16], strides = [1, 1, 1]} : vector<3x8x16xf32> to vector<1x8x16xf32>
    %22 = vector.shape_cast %21 : vector<1x8x16xf32> to vector<8x16xf32>
    %23 = math.cos %22 : vector<8x16xf32>
    %24 = math.sin %22 : vector<8x16xf32>
    %25 = arith.mulf %23, %14 : vector<8x16xf32>
    %26 = arith.addf %13, %25 : vector<8x16xf32>
    %27 = arith.mulf %24, %18 : vector<8x16xf32>
    %28 = arith.subf %26, %27 : vector<8x16xf32>
    %29 = arith.mulf %24, %14 : vector<8x16xf32>
    %30 = arith.addf %17, %29 : vector<8x16xf32>
    %31 = arith.mulf %23, %18 : vector<8x16xf32>
    %32 = arith.addf %30, %31 : vector<8x16xf32>
    %33 = vector.extract_strided_slice %20 {offsets = [1, 0, 0], sizes = [1, 8, 16], strides = [1, 1, 1]} : vector<3x8x16xf32> to vector<1x8x16xf32>
    %34 = vector.shape_cast %33 : vector<1x8x16xf32> to vector<8x16xf32>
    %35 = math.cos %34 : vector<8x16xf32>
    %36 = math.sin %34 : vector<8x16xf32>
    %37 = arith.mulf %35, %13 : vector<8x16xf32>
    %38 = arith.addf %12, %37 : vector<8x16xf32>
    %39 = arith.mulf %36, %17 : vector<8x16xf32>
    %40 = arith.subf %38, %39 : vector<8x16xf32>
    %41 = arith.mulf %36, %13 : vector<8x16xf32>
    %42 = arith.addf %16, %41 : vector<8x16xf32>
    %43 = arith.mulf %35, %17 : vector<8x16xf32>
    %44 = arith.addf %42, %43 : vector<8x16xf32>
    %45 = arith.mulf %35, %28 : vector<8x16xf32>
    %46 = arith.addf %12, %45 : vector<8x16xf32>
    %47 = arith.mulf %36, %32 : vector<8x16xf32>
    %48 = arith.subf %46, %47 : vector<8x16xf32>
    %49 = arith.mulf %36, %28 : vector<8x16xf32>
    %50 = arith.addf %16, %49 : vector<8x16xf32>
    %51 = arith.mulf %35, %32 : vector<8x16xf32>
    %52 = arith.addf %50, %51 : vector<8x16xf32>
    %53 = vector.extract_strided_slice %20 {offsets = [0, 0, 0], sizes = [1, 8, 16], strides = [1, 1, 1]} : vector<3x8x16xf32> to vector<1x8x16xf32>
    %54 = vector.shape_cast %53 : vector<1x8x16xf32> to vector<8x16xf32>
    %55 = math.cos %54 : vector<8x16xf32>
    %56 = math.sin %54 : vector<8x16xf32>
    %57 = arith.mulf %55, %12 : vector<8x16xf32>
    %58 = arith.addf %11, %57 : vector<8x16xf32>
    %59 = arith.mulf %56, %16 : vector<8x16xf32>
    %60 = arith.subf %58, %59 : vector<8x16xf32>
    %61 = arith.mulf %56, %12 : vector<8x16xf32>
    %62 = arith.addf %15, %61 : vector<8x16xf32>
    %63 = arith.mulf %55, %16 : vector<8x16xf32>
    %64 = arith.addf %62, %63 : vector<8x16xf32>
    %65 = arith.mulf %55, %40 : vector<8x16xf32>
    %66 = arith.addf %11, %65 : vector<8x16xf32>
    %67 = arith.mulf %56, %44 : vector<8x16xf32>
    %68 = arith.subf %66, %67 : vector<8x16xf32>
    %69 = arith.mulf %56, %40 : vector<8x16xf32>
    %70 = arith.addf %15, %69 : vector<8x16xf32>
    %71 = arith.mulf %55, %44 : vector<8x16xf32>
    %72 = arith.addf %70, %71 : vector<8x16xf32>
    %73 = arith.mulf %55, %48 : vector<8x16xf32>
    %74 = arith.addf %11, %73 : vector<8x16xf32>
    %75 = arith.mulf %56, %52 : vector<8x16xf32>
    %76 = arith.subf %74, %75 : vector<8x16xf32>
    %77 = arith.mulf %56, %48 : vector<8x16xf32>
    %78 = arith.addf %15, %77 : vector<8x16xf32>
    %79 = arith.mulf %55, %52 : vector<8x16xf32>
    %80 = arith.addf %78, %79 : vector<8x16xf32>
    %81 = tpu.concatenate %11, %15 in 1 : vector<8x16xf32>, vector<8x16xf32> -> vector<8x32xf32>
    %cst_12 = arith.constant 1.000000e+00 : f32
    %82 = vector.broadcast %cst_12 : f32 to vector<8x32xf32>
    %83 = arith.mulf %81, %82 : vector<8x32xf32>
    %84 = tpu.concatenate %60, %64 in 1 : vector<8x16xf32>, vector<8x16xf32> -> vector<8x32xf32>
    %cst_13 = arith.constant 5.000000e-01 : f32
    %85 = vector.broadcast %cst_13 : f32 to vector<8x32xf32>
    %86 = arith.mulf %84, %85 : vector<8x32xf32>
    %87 = tpu.concatenate %68, %72 in 1 : vector<8x16xf32>, vector<8x16xf32> -> vector<8x32xf32>
    %cst_14 = arith.constant 0.333333343 : f32
    %88 = vector.broadcast %cst_14 : f32 to vector<8x32xf32>
    %89 = arith.mulf %87, %88 : vector<8x32xf32>
    %90 = tpu.concatenate %76, %80 in 1 : vector<8x16xf32>, vector<8x16xf32> -> vector<8x32xf32>
    %cst_15 = arith.constant 2.500000e-01 : f32
    %91 = vector.broadcast %cst_15 : f32 to vector<8x32xf32>
    %92 = arith.mulf %90, %91 : vector<8x32xf32>
    %93 = tpu.concatenate %83, %86 in 1 : vector<8x32xf32>, vector<8x32xf32> -> vector<8x64xf32>
    %94 = tpu.concatenate %83, %89 in 1 : vector<8x32xf32>, vector<8x32xf32> -> vector<8x64xf32>
    %95 = tpu.concatenate %83, %92 in 1 : vector<8x32xf32>, vector<8x32xf32> -> vector<8x64xf32>
    %96 = tpu.concatenate %93, %94, %95 in 0 : vector<8x64xf32>, vector<8x64xf32>, vector<8x64xf32> -> vector<24x64xf32>
    %97 = arith.truncf %96 : vector<24x64xf32> to vector<24x64xbf16>
    %c0_16 = arith.constant 0 : index
    %c0_17 = arith.constant 0 : index
    %98 = vector.load %arg7[%c0_16, %c0_17] : memref<64x64xbf16, #tpu.memory_space<vmem>>, vector<64x64xbf16>
    %cst_18 = arith.constant dense<0.000000e+00> : vector<24x64xf32>
    %99 = tpu.matmul %97, %98, %cst_18 {dimension_numbers = #tpu.dot_dimension_numbers<[1], [0], [0], [1], [0, 0, 1, 1], [], []>} : vector<24x64xbf16>, vector<64x64xbf16>, vector<24x64xf32> -> vector<24x64xf32>
    %c0_19 = arith.constant 0 : index
    %c0_20 = arith.constant 0 : index
    %100 = vector.load %arg8[%c0_19, %c0_20] : memref<1x64xf32, #tpu.memory_space<vmem>>, vector<1x64xf32>
    %101 = vector.broadcast %100 : vector<1x64xf32> to vector<24x64xf32>
    %102 = arith.addf %99, %101 : vector<24x64xf32>
    %103 = math.tanh %102 : vector<24x64xf32>
    %c0_21 = arith.constant 0 : index
    %c0_22 = arith.constant 0 : index
    %104 = vector.load %arg9[%c0_21, %c0_22] : memref<1x64xf32, #tpu.memory_space<vmem>>, vector<1x64xf32>
    %105 = vector.broadcast %104 : vector<1x64xf32> to vector<24x64xf32>
    %106 = arith.mulf %103, %105 : vector<24x64xf32>
    %cst_23 = arith.constant dense<0.000000e+00> : vector<24xf32>
    %107 = vector.multi_reduction <add>, %106, %cst_23 [1] : vector<24x64xf32> to vector<24xf32>
    %108 = vector.shape_cast %107 : vector<24xf32> to vector<24x1xf32>
    %109 = vector.extract_strided_slice %108 {offsets = [0, 0], sizes = [8, 1], strides = [1, 1]} : vector<24x1xf32> to vector<8x1xf32>
    %c1_i32 = arith.constant 1 : i32
    %110 = arith.cmpi sgt, %1, %c1_i32 : i32
    %111 = arith.extui %110 : i1 to i32
    %112 = arith.sitofp %111 : i32 to f32
    %113 = vector.broadcast %112 : f32 to vector<8x1xf32>
    %114 = arith.mulf %109, %113 : vector<8x1xf32>
    %cst_24 = arith.constant 1.000000e+00 : f32
    %115 = arith.subf %112, %cst_24 : f32
    %cst_25 = arith.constant 1.000000e+30 : f32
    %116 = arith.mulf %115, %cst_25 : f32
    %117 = vector.broadcast %116 : f32 to vector<8x1xf32>
    %118 = arith.addf %114, %117 : vector<8x1xf32>
    %119 = vector.extract_strided_slice %108 {offsets = [8, 0], sizes = [8, 1], strides = [1, 1]} : vector<24x1xf32> to vector<8x1xf32>
    %c2_i32 = arith.constant 2 : i32
    %120 = arith.cmpi sgt, %1, %c2_i32 : i32
    %121 = arith.extui %120 : i1 to i32
    %122 = arith.sitofp %121 : i32 to f32
    %123 = vector.broadcast %122 : f32 to vector<8x1xf32>
    %124 = arith.mulf %119, %123 : vector<8x1xf32>
    %cst_26 = arith.constant 1.000000e+00 : f32
    %125 = arith.subf %122, %cst_26 : f32
    %cst_27 = arith.constant 1.000000e+30 : f32
    %126 = arith.mulf %125, %cst_27 : f32
    %127 = vector.broadcast %126 : f32 to vector<8x1xf32>
    %128 = arith.addf %124, %127 : vector<8x1xf32>
    %129 = vector.extract_strided_slice %108 {offsets = [16, 0], sizes = [8, 1], strides = [1, 1]} : vector<24x1xf32> to vector<8x1xf32>
    %c3_i32 = arith.constant 3 : i32
    %130 = arith.cmpi sgt, %1, %c3_i32 : i32
    %131 = arith.extui %130 : i1 to i32
    %132 = arith.sitofp %131 : i32 to f32
    %133 = vector.broadcast %132 : f32 to vector<8x1xf32>
    %134 = arith.mulf %129, %133 : vector<8x1xf32>
    %cst_28 = arith.constant 1.000000e+00 : f32
    %135 = arith.subf %132, %cst_28 : f32
    %cst_29 = arith.constant 1.000000e+30 : f32
    %136 = arith.mulf %135, %cst_29 : f32
    %137 = vector.broadcast %136 : f32 to vector<8x1xf32>
    %138 = arith.addf %134, %137 : vector<8x1xf32>
    %139 = arith.maximumf %118, %128 : vector<8x1xf32>
    %140 = arith.maximumf %139, %138 : vector<8x1xf32>
    %141 = arith.subf %118, %140 : vector<8x1xf32>
    %142 = math.exp %141 : vector<8x1xf32>
    %143 = arith.subf %128, %140 : vector<8x1xf32>
    %144 = math.exp %143 : vector<8x1xf32>
    %145 = arith.subf %138, %140 : vector<8x1xf32>
    %146 = math.exp %145 : vector<8x1xf32>
    %147 = arith.addf %142, %144 : vector<8x1xf32>
    %148 = arith.addf %147, %146 : vector<8x1xf32>
    %149 = tpu.reciprocal %148 {approx = true} : vector<8x1xf32> -> vector<8x1xf32>
    %150 = arith.mulf %142, %149 : vector<8x1xf32>
    %151 = vector.broadcast %150 : vector<8x1xf32> to vector<8x64xf32>
    %152 = arith.mulf %93, %151 : vector<8x64xf32>
    %153 = arith.mulf %144, %149 : vector<8x1xf32>
    %154 = vector.broadcast %153 : vector<8x1xf32> to vector<8x64xf32>
    %155 = arith.mulf %94, %154 : vector<8x64xf32>
    %156 = arith.addf %152, %155 : vector<8x64xf32>
    %157 = arith.mulf %146, %149 : vector<8x1xf32>
    %158 = vector.broadcast %157 : vector<8x1xf32> to vector<8x64xf32>
    %159 = arith.mulf %95, %158 : vector<8x64xf32>
    %160 = arith.addf %156, %159 : vector<8x64xf32>
    %cst_30 = arith.constant 0.000000e+00 : f32
    %161 = vector.broadcast %cst_30 : f32 to vector<8x64xf32>
    %162 = arith.maximumf %160, %161 : vector<8x64xf32>
    %c0_31 = arith.constant 0 : index
    %c0_32 = arith.constant 0 : index
    %c0_33 = arith.constant 0 : index
    %163 = vector.load %arg10[%c0_31, %c0_32, %c0_33] : memref<1x8x64xf32, #tpu.memory_space<vmem>>, vector<1x8x64xf32>
    %164 = vector.shape_cast %163 : vector<1x8x64xf32> to vector<8x64xf32>
    %165 = vector.shape_cast %162 : vector<8x64xf32> to vector<1x8x64xf32>
    tpu.vector_store %arg10[%c0_31, %c0_32, %c0_33], %165 {strides = array<i32>} : memref<1x8x64xf32, #tpu.memory_space<vmem>>, vector<1x8x64xf32>,
    return
  }
  func.func @transform_0(%arg0: i32, %arg1: i32, %arg2: memref<2xi32, #tpu.memory_space<smem>>) -> (i32, i32, i32) {
    %c0_i32 = arith.constant 0 : i32
    %c0_i32_0 = arith.constant 0 : i32
    return %arg0, %arg1, %c0_i32 : i32, i32, i32
  }
  func.func @transform_1(%arg0: i32, %arg1: i32, %arg2: memref<2xi32, #tpu.memory_space<smem>>) -> (i32, i32, i32, i32) {
    %c0_i32 = arith.constant 0 : i32
    %c0_i32_0 = arith.constant 0 : i32
    %c0_i32_1 = arith.constant 0 : i32
    return %arg0, %c0_i32, %arg1, %c0_i32_0 : i32, i32, i32, i32
  }
  func.func @transform_2(%arg0: i32, %arg1: i32, %arg2: memref<2xi32, #tpu.memory_space<smem>>) -> (i32, i32, i32) {
    %c0_i32 = arith.constant 0 : i32
    %c0_i32_0 = arith.constant 0 : i32
    %c0_i32_1 = arith.constant 0 : i32
    return %arg0, %c0_i32, %c0_i32_0 : i32, i32, i32
  }
  func.func @transform_3(%arg0: i32, %arg1: i32, %arg2: memref<2xi32, #tpu.memory_space<smem>>) -> (i32, i32, i32) {
    %c0_i32 = arith.constant 0 : i32
    %c0_i32_0 = arith.constant 0 : i32
    %c0_i32_1 = arith.constant 0 : i32
    return %arg0, %c0_i32, %c0_i32_0 : i32, i32, i32
  }
  func.func @transform_4(%arg0: i32, %arg1: i32, %arg2: memref<2xi32, #tpu.memory_space<smem>>) -> (i32, i32) {
    %c0_i32 = arith.constant 0 : i32
    %c0_i32_0 = arith.constant 0 : i32
    %c0_i32_1 = arith.constant 0 : i32
    return %c0_i32, %c0_i32_0 : i32, i32
  }
  func.func @transform_5(%arg0: i32, %arg1: i32, %arg2: memref<2xi32, #tpu.memory_space<smem>>) -> (i32, i32) {
    %c0_i32 = arith.constant 0 : i32
    %c0_i32_0 = arith.constant 0 : i32
    %c0_i32_1 = arith.constant 0 : i32
    return %c0_i32, %c0_i32_0 : i32, i32
  }
  func.func @transform_6(%arg0: i32, %arg1: i32, %arg2: memref<2xi32, #tpu.memory_space<smem>>) -> (i32, i32) {
    %c0_i32 = arith.constant 0 : i32
    %c0_i32_0 = arith.constant 0 : i32
    %c0_i32_1 = arith.constant 0 : i32
    return %c0_i32, %c0_i32_0 : i32, i32
  }
  func.func @transform_7(%arg0: i32, %arg1: i32, %arg2: memref<2xi32, #tpu.memory_space<smem>>) -> (i32, i32, i32) {
    %c0_i32 = arith.constant 0 : i32
    %c0_i32_0 = arith.constant 0 : i32
    return %arg0, %arg1, %c0_i32 : i32, i32, i32
  }
}

</mosaic_0001>

<llo_original>
// kernel: tpu_custom_call.1
$region0: #{tpu_custom_call.1}
  #allocation0 [shape = 'u32[]', space=smem, size = 0x4, offset = 0x4, fixed_abs, tag = 'smem constant byte address 0x4 - core index']
  #allocation1 [shape = 'u32[144,128]{1,0:T(1,128)}', space=vmem, size = 0x12000, scoped, tag = 'internal scratch']
  #allocation2 [shape = 's32[1]{0}', space=sflag, size = 0x4, scoped, tag = 'scoped memory for tpu_custom_call.1']
  #allocation3 [shape = 'u8[512]{0}', space=smem, size = 0x200, scoped, tag = 'prefetched SMEM operand 0']
  %s0 = inlined_call_operand.hbm [shape: s32[2], index: 0, kind: input, shape index: {}]
  %s1 = inlined_call_operand.hbm [shape: bf16[2,8,128], index: 1, kind: input, shape index: {}]
  %s2 = inlined_call_operand.hbm [shape: f32[2,3,8,16], index: 2, kind: input, shape index: {}]
  %s3 = inlined_call_operand.hbm [shape: bf16[2,128,128], index: 3, kind: input, shape index: {}]
  %s4 = inlined_call_operand.vmem [shape: f32[2,1,128], index: 4, kind: input, shape index: {}]
  %s5 = inlined_call_operand.hbm [shape: bf16[64,64], index: 5, kind: input, shape index: {}]
  %s6 = inlined_call_operand.vmem [shape: f32[1,64], index: 6, kind: input, shape index: {}]
  %s7 = inlined_call_operand.vmem [shape: f32[1,64], index: 7, kind: input, shape index: {}]
  %s8 = inlined_call_operand.hbm [shape: f32[2,8,64], index: 8, kind: output, shape index: {}]
  %s9 = sld [smem:[#allocation0]]
  $region77: #{tpu_custom_call.1} parent=0
    _
  %s11 = ssub.s32 1, %s9
  %s12 = scalar_select 0, %s11, %s9
  %14 = dma.hbm_to_smem %s0, 16, [#allocation3], [#allocation2]
  %15 = dma.done [#allocation2], 16
  %16 = sfence
  $region1: #{tpu_custom_call.1} parent=0
    #allocation4 [shape = 'u8[4096]{0}', space=vmem, size = 0x1000, scoped, tag = 'input window, operand 1']
    #allocation5 [shape = 's32[2]{0}', space=sflag, size = 0x8, scoped, tag = 'scoped memory for tpu_custom_call.1']
    #allocation6 [shape = 's32[2]{0}', space=sflag, size = 0x8, scoped, tag = 'scoped memory for tpu_custom_call.1']
    #allocation7 [shape = 'u8[24576]{0}', space=vmem, size = 0x6000, scoped, tag = 'input window, operand 2']
    #allocation8 [shape = 's32[2]{0}', space=sflag, size = 0x8, scoped, tag = 'scoped memory for tpu_custom_call.1']
    #allocation9 [shape = 'u8[65536]{0}', space=vmem, size = 0x10000, scoped, tag = 'input window, operand 3']
    #allocation10 [shape = 'u8[16384]{0}', space=vmem, size = 0x4000, scoped, tag = 'input window, operand 5, single buffered']
    #allocation11 [shape = 's32[1]{0}', space=sflag, size = 0x4, scoped, tag = 'scoped memory for tpu_custom_call.1']
    #allocation12 [shape = 'u8[8192]{0}', space=vmem, size = 0x2000, scoped, tag = 'output window, operand 0']
    %17 = vsyncpa [#allocation5], 0
    %s18 = scalar_lea.sflag [#allocation5], 1
    %19 = vsyncpa %s18, 0
    %20 = vsyncpa [#allocation8], 0
    %s21 = scalar_lea.sflag [#allocation8], 1
    %22 = vsyncpa %s21, 0
    %23 = vsyncpa [#allocation11], 0
    %24 = vsyncpa [#allocation6], 0
    %s25 = scalar_lea.sflag [#allocation6], 1
    %26 = vsyncpa %s25, 0
    loop: start=0, step=1, limit=4
    $region2: #{tpu_custom_call.1} parent=1 // loop_pre_header
      _
    $region3: #{tpu_custom_call.1} parent=1 // loop_header
      %s28 = sphi 0, %s32
      %p29 = scmp.ge.s32.totalorder %s28, 4
      %s35 = sphi 0, %s47
      %s36 = sphi 0, %s43
      %s37 = sphi 0, %s35
      %s38 = sphi 0, %s36
      %s39 = sphi 0, %s37
      %s40 = sphi 0, %s38
      %s52 = sphi 0, %s54
      %s55 = sphi 0, %s52
      %s56 = sphi 0, %s55
      %s72 = sphi 0, %s56
      %s80 = sphi 0, %s82
      %s83 = sphi 0, %s80
      %s84 = sphi 0, %s83
      %s100 = sphi 0, %s84
      %s106 = sphi 0, %s108
      %s109 = sphi 0, %s106
      %s110 = sphi 0, %s109
      %s126 = sphi 0, %s110
      %s132 = sphi 0, %s134
      %s135 = sphi 0, %s132
      %s136 = sphi 0, %s135
      %s152 = sphi 0, %s136
      %s156 = sphi 0, %s156
      %s158 = sphi 0, %s156
      %s159 = sphi 0, %s158
      %s173 = sphi 0, %s159
      %s177 = sphi 0, %s177
      %s179 = sphi 0, %s177
      %s180 = sphi 0, %s179
      %s194 = sphi 0, %s180
      %s198 = sphi 0, %s198
      %s200 = sphi 0, %s198
      %s201 = sphi 0, %s200
      %s215 = sphi 0, %s201
      %s223 = sphi 0, %s225
      %s226 = sphi 0, %s223
      %s227 = sphi 0, %s226
      %s243 = sphi 0, %s227
    $region4: #{tpu_custom_call.1} parent=1 // loop_header_branch
      %31 = sbr.rel (%p29) target = $region8
    $region5: #{tpu_custom_call.1} parent=1 // loop_body
      %s33 = ssub.s32 %s28, 1
      %s34 = ssub.s32 %s28, 2
      %s41 = sadd.s32 1, %s36
      %p42 = scmp.ge.s32.totalorder %s41, 1
      %s43 = scalar_select %p42, 0, %s41
      %s44 = sadd.s32 1, %s35
      %s45 = scalar_select %p42, %s44, %s35
      %p46 = scmp.ge.s32.totalorder %s45, 2
      %s47 = scalar_select %p46, 0, %s45
      %s48 = ssub.s32 %s35, %s47
      %s49 = ssub.s32 %s36, %s43
      %s50 = sor.u32 %s48, %s49
      %p51 = scmp.eq.s32.totalorder %s50, 0
      %s53 = sadd.s32 %s52, 1
      %s54 = scalar_select %p51, %s52, %s53
      %p57 = pneg %p51
      %p58 = scmp.eq.s32.totalorder %s28, 1
      %p59 = por %p57, %p58
      %p60 = scmp.ne.s32.totalorder %s52, %s55
      %p61 = scmp.eq.s32.totalorder %s28, 0
      %p62 = por %p60, %p61
      %p63 = scmp.ne.s32.totalorder %s52, %s55
      %p64 = scmp.eq.s32.totalorder %s33, 1
      %p65 = por %p63, %p64
      %p66 = scmp.ne.s32.totalorder %s55, %s56
      %p67 = scmp.eq.s32.totalorder %s33, 0
      %p68 = por %p66, %p67
      %p69 = scmp.ne.s32.totalorder %s55, %s56
      %p70 = scmp.eq.s32.totalorder %s34, 1
      %p71 = por %p69, %p70
      %p73 = scmp.ne.s32.totalorder %s56, %s72
      %p74 = scmp.eq.s32.totalorder %s34, 0
      %p75 = por %p73, %p74
      %s76 = ssub.s32 %s35, %s47
      %s77 = ssub.s32 %s36, %s43
      %s78 = sor.u32 %s76, %s77
      %p79 = scmp.eq.s32.totalorder %s78, 0
      %s81 = sadd.s32 %s80, 1
      %s82 = scalar_select %p79, %s80, %s81
      %p85 = pneg %p79
      %p86 = scmp.eq.s32.totalorder %s28, 1
      %p87 = por %p85, %p86
      %p88 = scmp.ne.s32.totalorder %s80, %s83
      %p89 = scmp.eq.s32.totalorder %s28, 0
      %p90 = por %p88, %p89
      %p91 = scmp.ne.s32.totalorder %s80, %s83
      %p92 = scmp.eq.s32.totalorder %s33, 1
      %p93 = por %p91, %p92
      %p94 = scmp.ne.s32.totalorder %s83, %s84
      %p95 = scmp.eq.s32.totalorder %s33, 0
      %p96 = por %p94, %p95
      %p97 = scmp.ne.s32.totalorder %s83, %s84
      %p98 = scmp.eq.s32.totalorder %s34, 1
      %p99 = por %p97, %p98
      %p101 = scmp.ne.s32.totalorder %s84, %s100
      %p102 = scmp.eq.s32.totalorder %s34, 0
      %p103 = por %p101, %p102
      %s104 = ssub.s32 %s35, %s47
      %p105 = scmp.eq.s32.totalorder %s104, 0
      %s107 = sadd.s32 %s106, 1
      %s108 = scalar_select %p105, %s106, %s107
      %p111 = pneg %p105
      %p112 = scmp.eq.s32.totalorder %s28, 1
      %p113 = por %p111, %p112
      %p114 = scmp.ne.s32.totalorder %s106, %s109
      %p115 = scmp.eq.s32.totalorder %s28, 0
      %p116 = por %p114, %p115
      %p117 = scmp.ne.s32.totalorder %s106, %s109
      %p118 = scmp.eq.s32.totalorder %s33, 1
      %p119 = por %p117, %p118
      %p120 = scmp.ne.s32.totalorder %s109, %s110
      %p121 = scmp.eq.s32.totalorder %s33, 0
      %p122 = por %p120, %p121
      %p123 = scmp.ne.s32.totalorder %s109, %s110
      %p124 = scmp.eq.s32.totalorder %s34, 1
      %p125 = por %p123, %p124
      %p127 = scmp.ne.s32.totalorder %s110, %s126
      %p128 = scmp.eq.s32.totalorder %s34, 0
      %p129 = por %p127, %p128
      %s130 = ssub.s32 %s35, %s47
      %p131 = scmp.eq.s32.totalorder %s130, 0
      %s133 = sadd.s32 %s132, 1
      %s134 = scalar_select %p131, %s132, %s133
      %p137 = pneg %p131
      %p138 = scmp.eq.s32.totalorder %s28, 1
      %p139 = por %p137, %p138
      %p140 = scmp.ne.s32.totalorder %s132, %s135
      %p141 = scmp.eq.s32.totalorder %s28, 0
      %p142 = por %p140, %p141
      %p143 = scmp.ne.s32.totalorder %s132, %s135
      %p144 = scmp.eq.s32.totalorder %s33, 1
      %p145 = por %p143, %p144
      %p146 = scmp.ne.s32.totalorder %s135, %s136
      %p147 = scmp.eq.s32.totalorder %s33, 0
      %p148 = por %p146, %p147
      %p149 = scmp.ne.s32.totalorder %s135, %s136
      %p150 = scmp.eq.s32.totalorder %s34, 1
      %p151 = por %p149, %p150
      %p153 = scmp.ne.s32.totalorder %s136, %s152
      %p154 = scmp.eq.s32.totalorder %s34, 0
      %p155 = por %p153, %p154
      %s157 = sadd.s32 %s156, 1
      %p160 = scmp.eq.s32.totalorder %s28, 1
      %p161 = scmp.ne.s32.totalorder %s156, %s158
      %p162 = scmp.eq.s32.totalorder %s28, 0
      %p163 = por %p161, %p162
      %p164 = scmp.ne.s32.totalorder %s156, %s158
      %p165 = scmp.eq.s32.totalorder %s33, 1
      %p166 = por %p164, %p165
      %p167 = scmp.ne.s32.totalorder %s158, %s159
      %p168 = scmp.eq.s32.totalorder %s33, 0
      %p169 = por %p167, %p168
      %p170 = scmp.ne.s32.totalorder %s158, %s159
      %p171 = scmp.eq.s32.totalorder %s34, 1
      %p172 = por %p170, %p171
      %p174 = scmp.ne.s32.totalorder %s159, %s173
      %p175 = scmp.eq.s32.totalorder %s34, 0
      %p176 = por %p174, %p175
      %s178 = sadd.s32 %s177, 1
      %p181 = scmp.eq.s32.totalorder %s28, 1
      %p182 = scmp.ne.s32.totalorder %s177, %s179
      %p183 = scmp.eq.s32.totalorder %s28, 0
      %p184 = por %p182, %p183
      %p185 = scmp.ne.s32.totalorder %s177, %s179
      %p186 = scmp.eq.s32.totalorder %s33, 1
      %p187 = por %p185, %p186
      %p188 = scmp.ne.s32.totalorder %s179, %s180
      %p189 = scmp.eq.s32.totalorder %s33, 0
      %p190 = por %p188, %p189
      %p191 = scmp.ne.s32.totalorder %s179, %s180
      %p192 = scmp.eq.s32.totalorder %s34, 1
      %p193 = por %p191, %p192
      %p195 = scmp.ne.s32.totalorder %s180, %s194
      %p196 = scmp.eq.s32.totalorder %s34, 0
      %p197 = por %p195, %p196
      %s199 = sadd.s32 %s198, 1
      %p202 = scmp.eq.s32.totalorder %s28, 1
      %p203 = scmp.ne.s32.totalorder %s198, %s200
      %p204 = scmp.eq.s32.totalorder %s28, 0
      %p205 = por %p203, %p204
      %p206 = scmp.ne.s32.totalorder %s198, %s200
      %p207 = scmp.eq.s32.totalorder %s33, 1
      %p208 = por %p206, %p207
      %p209 = scmp.ne.s32.totalorder %s200, %s201
      %p210 = scmp.eq.s32.totalorder %s33, 0
      %p211 = por %p209, %p210
      %p212 = scmp.ne.s32.totalorder %s200, %s201
      %p213 = scmp.eq.s32.totalorder %s34, 1
      %p214 = por %p212, %p213
      %p216 = scmp.ne.s32.totalorder %s201, %s215
      %p217 = scmp.eq.s32.totalorder %s34, 0
      %p218 = por %p216, %p217
      %s219 = ssub.s32 %s35, %s47
      %s220 = ssub.s32 %s36, %s43
      %s221 = sor.u32 %s219, %s220
      %p222 = scmp.eq.s32.totalorder %s221, 0
      %s224 = sadd.s32 %s223, 1
      %s225 = scalar_select %p222, %s223, %s224
      %p228 = pneg %p222
      %p229 = scmp.eq.s32.totalorder %s28, 1
      %p230 = por %p228, %p229
      %p231 = scmp.ne.s32.totalorder %s223, %s226
      %p232 = scmp.eq.s32.totalorder %s28, 0
      %p233 = por %p231, %p232
      %p234 = scmp.ne.s32.totalorder %s223, %s226
      %p235 = scmp.eq.s32.totalorder %s33, 1
      %p236 = por %p234, %p235
      %p237 = scmp.ne.s32.totalorder %s226, %s227
      %p238 = scmp.eq.s32.totalorder %s33, 0
      %p239 = por %p237, %p238
      %p240 = scmp.ne.s32.totalorder %s226, %s227
      %p241 = scmp.eq.s32.totalorder %s34, 1
      %p242 = por %p240, %p241
      %p244 = scmp.ne.s32.totalorder %s227, %s243
      %p245 = scmp.eq.s32.totalorder %s34, 0
      %p246 = por %p244, %p245
      %p247 = scmp.le.s32.totalorder 1, %s28
      %p248 = scmp.lt.s32.totalorder %s28, 3
      %p249 = pnand %p247, %p248
      %p250 = pneg %p249
      // Predicated region
      $region9: #{tpu_custom_call.1} parent=5 // pred_check
        _
      $region10: #{tpu_custom_call.1} parent=5 // pred_check_branch
        %252 = sbr.rel (%p249) target = $region12
      $region11: #{tpu_custom_call.1} parent=5 // pred_region
        %s253 = ssub.s32 %s28, 1
        // Predicated region
        $region13: #{tpu_custom_call.1} parent=11 // pred_check
          %p254 = pneg %p169
        $region14: #{tpu_custom_call.1} parent=11 // pred_check_branch
          %256 = sbr.rel (%p254) target = $region16
        $region15: #{tpu_custom_call.1} parent=11 // pred_region
          %s258 = ssub.s32 512, 512
          %259 = vsyncadd [#allocation11], %s258
          %s260 = sshll.u32 [#allocation10], 4
          %s261 = int_to_ptr.vmem [resolvable:$true] %s260
          %266 = dma.hbm_to_vmem [thread:$0]  %s5, 512, %s261, [#allocation11], 64, 64, 4
        $region16: #{tpu_custom_call.1} parent=11 // pred_fallthru
          _
        // Predicated region
        $region17: #{tpu_custom_call.1} parent=11 // pred_check
          %p267 = pneg %p190
        $region18: #{tpu_custom_call.1} parent=11 // pred_check_branch
          %269 = sbr.rel (%p267) target = $region20
        $region19: #{tpu_custom_call.1} parent=11 // pred_region
          _
        $region20: #{tpu_custom_call.1} parent=11 // pred_fallthru
          _
        // Predicated region
        $region21: #{tpu_custom_call.1} parent=11 // pred_check
          %p270 = pneg %p211
        $region22: #{tpu_custom_call.1} parent=11 // pred_check_branch
          %272 = sbr.rel (%p270) target = $region24
        $region23: #{tpu_custom_call.1} parent=11 // pred_region
          _
        $region24: #{tpu_custom_call.1} parent=11 // pred_fallthru
          _
      $region12: #{tpu_custom_call.1} parent=5 // pred_fallthru
        _
      %p273 = scmp.lt.s32.totalorder %s28, 2
      // Predicated region
      $region25: #{tpu_custom_call.1} parent=5 // pred_check
        %p274 = pneg %p273
      $region26: #{tpu_custom_call.1} parent=5 // pred_check_branch
        %276 = sbr.rel (%p274) target = $region28
      $region27: #{tpu_custom_call.1} parent=5 // pred_region
        // Predicated region
        $region29: #{tpu_custom_call.1} parent=27 // pred_check
          %p277 = pneg %p62
        $region30: #{tpu_custom_call.1} parent=27 // pred_check_branch
          %279 = sbr.rel (%p277) target = $region32
        $region31: #{tpu_custom_call.1} parent=27 // pred_region
          %s280 = sand.u32 %s52, 1
          %s281 = scalar_lea.sflag [#allocation5], %s280
          %s282 = sand.u32 %s52, 1
          %s283 = smul.addr %s282, 4
          %s284 = scalar_lea.vmem [#allocation4], %s283
          %s286 = ssub.s32 64, 64
          %287 = vsyncadd %s281, %s286
          %s288 = sadd.s32 %s36, %s35
          %s289 = smul.addr %s288, 64
          %s290 = scalar_lea.hbm %s1, %s289
          %s292 = sshll.u32 %s284, 4
          %s293 = int_to_ptr.vmem [resolvable:$true] %s292
          %295 = dma.hbm_to_vmem [thread:$0]  %s290, 64, %s293, %s281
        $region32: #{tpu_custom_call.1} parent=27 // pred_fallthru
          _
        // Predicated region
        $region33: #{tpu_custom_call.1} parent=27 // pred_check
          %p296 = pneg %p90
        $region34: #{tpu_custom_call.1} parent=27 // pred_check_branch
          %298 = sbr.rel (%p296) target = $region36
        $region35: #{tpu_custom_call.1} parent=27 // pred_region
          %s299 = sand.u32 %s28, 1
          %s300 = scalar_lea.sflag [#allocation8], %s299
          %s301 = sand.u32 %s80, 1
          %s302 = smul.addr %s301, 24
          %s303 = scalar_lea.vmem [#allocation7], %s302
          %s305 = ssub.s32 384, 384
          %306 = vsyncadd %s300, %s305
          %s307 = smul.addr %s35, 3
          %s308 = sadd.s32 %s36, %s307
          %s309 = smul.addr %s308, 128
          %s310 = scalar_lea.hbm %s2, %s309
          %s311 = sshll.u32 %s303, 4
          %s312 = int_to_ptr.vmem [resolvable:$true] %s311
          %317 = dma.hbm_to_vmem [thread:$0]  %s310, 384, %s312, %s300, 128, 128, 8
        $region36: #{tpu_custom_call.1} parent=27 // pred_fallthru
          _
        // Predicated region
        $region37: #{tpu_custom_call.1} parent=27 // pred_check
          %p318 = pneg %p116
        $region38: #{tpu_custom_call.1} parent=27 // pred_check_branch
          %320 = sbr.rel (%p318) target = $region40
        $region39: #{tpu_custom_call.1} parent=27 // pred_region
          %s321 = sand.u32 %s28, 1
          %s322 = scalar_lea.sflag [#allocation8], %s321
          %s323 = sand.u32 %s106, 1
          %s324 = smul.addr %s323, 64
          %s325 = scalar_lea.vmem [#allocation9], %s324
          %s327 = ssub.s32 1024, 1024
          %328 = vsyncadd %s322, %s327
          %s329 = smul.addr %s35, 16
          %s330 = smul.addr %s329, 64
          %s331 = scalar_lea.hbm %s3, %s330
          %s332 = sshll.u32 %s325, 4
          %s333 = int_to_ptr.vmem [resolvable:$true] %s332
          %338 = dma.hbm_to_vmem [thread:$0]  %s331, 1024, %s333, %s322, 64, 64, 4
        $region40: #{tpu_custom_call.1} parent=27 // pred_fallthru
          _
        // Predicated region
        $region41: #{tpu_custom_call.1} parent=27 // pred_check
          %p339 = pneg %p142
        $region42: #{tpu_custom_call.1} parent=27 // pred_check_branch
          %341 = sbr.rel (%p339) target = $region44
        $region43: #{tpu_custom_call.1} parent=27 // pred_region
          %p342 = scmp.lt.s32.totalorder %s35, 1
          %s343 = scalar_select %p342, %s35, 1
          %s344 = scalar_lea.vmem %s4, %s343
        $region44: #{tpu_custom_call.1} parent=27 // pred_fallthru
          _
      $region28: #{tpu_custom_call.1} parent=5 // pred_fallthru
        _
      %p345 = scmp.le.s32.totalorder 1, %s28
      %p346 = scmp.lt.s32.totalorder %s28, 3
      %p347 = pnand %p345, %p346
      %p348 = pneg %p347
      // Predicated region
      $region45: #{tpu_custom_call.1} parent=5 // pred_check
        _
      $region46: #{tpu_custom_call.1} parent=5 // pred_check_branch
        %350 = sbr.rel (%p347) target = $region48
      $region47: #{tpu_custom_call.1} parent=5 // pred_region
        %s351 = ssub.s32 %s28, 1
        %s352 = sand.u32 %s55, 1
        %s353 = scalar_lea.sflag [#allocation5], %s352
        %s354 = sand.u32 %s55, 1
        %s355 = smul.addr %s354, 4
        %s356 = scalar_lea.vmem [#allocation4], %s355
        // Predicated region
        $region49: #{tpu_custom_call.1} parent=47 // pred_check
          %p357 = pneg %p68
        $region50: #{tpu_custom_call.1} parent=47 // pred_check_branch
          %359 = sbr.rel (%p357) target = $region52
        $region51: #{tpu_custom_call.1} parent=47 // pred_region
          %360 = dma.done %s353, 64
        $region52: #{tpu_custom_call.1} parent=47 // pred_fallthru
          _
        %s361 = sand.u32 %s33, 1
        %s362 = scalar_lea.sflag [#allocation8], %s361
        %s363 = sand.u32 %s83, 1
        %s364 = smul.addr %s363, 24
        %s365 = scalar_lea.vmem [#allocation7], %s364
        // Predicated region
        $region53: #{tpu_custom_call.1} parent=47 // pred_check
          %p366 = pneg %p96
        $region54: #{tpu_custom_call.1} parent=47 // pred_check_branch
          %368 = sbr.rel (%p366) target = $region56
        $region55: #{tpu_custom_call.1} parent=47 // pred_region
          %369 = dma.done %s362, 384
        $region56: #{tpu_custom_call.1} parent=47 // pred_fallthru
          _
        %s370 = sand.u32 %s33, 1
        %s371 = scalar_lea.sflag [#allocation8], %s370
        %s372 = sand.u32 %s109, 1
        %s373 = smul.addr %s372, 64
        %s374 = scalar_lea.vmem [#allocation9], %s373
        // Predicated region
        $region57: #{tpu_custom_call.1} parent=47 // pred_check
          %p375 = pneg %p122
        $region58: #{tpu_custom_call.1} parent=47 // pred_check_branch
          %377 = sbr.rel (%p375) target = $region60
        $region59: #{tpu_custom_call.1} parent=47 // pred_region
          %378 = dma.done %s371, 1024
        $region60: #{tpu_custom_call.1} parent=47 // pred_fallthru
          _
        // Predicated region
        $region61: #{tpu_custom_call.1} parent=47 // pred_check
          %p379 = pneg %p169
        $region62: #{tpu_custom_call.1} parent=47 // pred_check_branch
          %381 = sbr.rel (%p379) target = $region64
        $region63: #{tpu_custom_call.1} parent=47 // pred_region
          %382 = dma.done [#allocation11], 512
        $region64: #{tpu_custom_call.1} parent=47 // pred_fallthru
          _
        %s383 = sand.u32 %s55, 1
        %s384 = scalar_lea.sflag [#allocation5], %s383
        %s385 = sand.u32 %s55, 1
        %s386 = smul.addr %s385, 4
        %s387 = scalar_lea.vmem [#allocation4], %s386
        %p388 = pneg %p68
        %p389 = pneg %p65
        %s390 = sand.u32 %s33, 1
        %s391 = scalar_lea.sflag [#allocation8], %s390
        %s392 = sand.u32 %s83, 1
        %s393 = smul.addr %s392, 24
        %s394 = scalar_lea.vmem [#allocation7], %s393
        %p395 = pneg %p96
        %p396 = pneg %p93
        %s397 = sand.u32 %s33, 1
        %s398 = scalar_lea.sflag [#allocation8], %s397
        %s399 = sand.u32 %s109, 1
        %s400 = smul.addr %s399, 64
        %s401 = scalar_lea.vmem [#allocation9], %s400
        %p402 = pneg %p122
        %p403 = pneg %p119
        %p404 = scmp.lt.s32.totalorder %s37, 1
        %s405 = scalar_select %p404, %s37, 1
        %s406 = scalar_lea.vmem %s4, %s405
        %p407 = pneg %p148
        %p408 = pneg %p145
        %p409 = pneg %p169
        %p410 = pneg %p166
        %p411 = pneg %p190
        %p412 = pneg %p187
        %p413 = pneg %p211
        %p414 = pneg %p208
        %p415 = pneg %p239
        %p416 = pneg %p236
        %s417 = sand.u32 %s226, 1
        %s418 = scalar_lea.sflag [#allocation6], %s417
        %s419 = sand.u32 %s226, 1
        %s420 = smul.addr %s419, 8
        %s421 = scalar_lea.vmem [#allocation12], %s420
        %p422 = scmp.lt.s32.totalorder %s37, 1
        %s423 = scalar_select %p422, %s37, 1
        %s424 = scalar_lea.vmem %s4, %s423
        %s426 = sld [smem:[#allocation3 + %s37]]
        %v427 = vld [vmem:[%s356] sm:$0xf]
        %v428 = vld [vmem:[%s374] sm:$0xf]
        %v429 = vld [vmem:[%s374 + $0x4] sm:$0xf]
        %v430 = vld [vmem:[%s374 + $0x8] sm:$0xf]
        %v431 = vld [vmem:[%s374 + $0xc] sm:$0xf]
        %v432 = vld [vmem:[%s374 + $0x10] sm:$0xf]
        %v433 = vld [vmem:[%s374 + $0x14] sm:$0xf]
        %v434 = vld [vmem:[%s374 + $0x18] sm:$0xf]
        %v435 = vld [vmem:[%s374 + $0x1c] sm:$0xf]
        %v436 = vld [vmem:[%s374 + $0x20] sm:$0xf]
        %v437 = vld [vmem:[%s374 + $0x24] sm:$0xf]
        %v438 = vld [vmem:[%s374 + $0x28] sm:$0xf]
        %v439 = vld [vmem:[%s374 + $0x2c] sm:$0xf]
        %v440 = vld [vmem:[%s374 + $0x30] sm:$0xf]
        %v441 = vld [vmem:[%s374 + $0x34] sm:$0xf]
        %v442 = vld [vmem:[%s374 + $0x38] sm:$0xf]
        %v443 = vld [vmem:[%s374 + $0x3c] sm:$0xf]
        %v444 = vld [vmem:[%s424] sm:$0x1]
        %v446 = vlaneseq
        %v447 = vshrl.u32 %v446, 7
        %v448 = vsub.s32 0, %v447
        %v449 = vrot.slane %v444, %v448
        %v467 = vunpack.c.l.b16 %v428
        %v468 = vunpack.c.l.b16 %v429
        %v469 = vunpack.c.l.b16 %v430
        %v470 = vunpack.c.l.b16 %v431
        %v471 = vunpack.c.l.b16 %v432
        %v472 = vunpack.c.l.b16 %v433
        %v473 = vunpack.c.l.b16 %v434
        %v474 = vunpack.c.l.b16 %v435
        %v475 = vunpack.c.l.b16 %v436
        %v476 = vunpack.c.l.b16 %v437
        %v477 = vunpack.c.l.b16 %v438
        %v478 = vunpack.c.l.b16 %v439
        %v479 = vunpack.c.l.b16 %v440
        %v480 = vunpack.c.l.b16 %v441
        %v481 = vunpack.c.l.b16 %v442
        %v482 = vunpack.c.l.b16 %v443
        %v483 = vpack.c.b16 %v468, %v467
        %v484 = vpack.c.b16 %v470, %v469
        %v485 = vpack.c.b16 %v472, %v471
        %v486 = vpack.c.b16 %v474, %v473
        %v487 = vpack.c.b16 %v476, %v475
        %v488 = vpack.c.b16 %v478, %v477
        %v489 = vpack.c.b16 %v480, %v479
        %v490 = vpack.c.b16 %v482, %v481
        %499 = vmatprep.subr.bf16.mxu0 0
        %500 = vmatpush1.bf16.msra.mxu0 %v490
        %501 = vmatprep.subr.bf16.mxu0 0
        %502 = vmatpush1.bf16.msra.mxu0 %v489
        %503 = vmatprep.subr.bf16.mxu0 0
        %504 = vmatpush1.bf16.msra.mxu0 %v488
        %505 = vmatprep.subr.bf16.mxu0 0
        %506 = vmatpush1.bf16.msra.mxu0 %v487
        %507 = vmatprep.subr.bf16.mxu0 0
        %508 = vmatpush1.bf16.msra.mxu0 %v486
        %509 = vmatprep.subr.bf16.mxu0 0
        %510 = vmatpush1.bf16.msra.mxu0 %v485
        %511 = vmatprep.subr.bf16.mxu0 0
        %512 = vmatpush1.bf16.msra.mxu0 %v484
        %513 = vmatprep.subr.bf16.mxu0 0
        %514 = vmatpush1.bf16.msra.mxu0 %v483
        %515 = vmatprep.subr.bf16.mxu0 0
        %516 = vmatpush2.bf16.msra.mxu0 0
        %517 = vmatprep.subr.bf16.mxu0 0
        %518 = vmatpush2.bf16.msra.mxu0 0
        %519 = vmatprep.subr.bf16.mxu0 0
        %520 = vmatpush2.bf16.msra.mxu0 0
        %521 = vmatprep.subr.bf16.mxu0 0
        %522 = vmatpush2.bf16.msra.mxu0 0
        %523 = vmatprep.subr.bf16.mxu0 0
        %524 = vmatpush2.bf16.msra.mxu0 0
        %525 = vmatprep.subr.bf16.mxu0 0
        %526 = vmatpush2.bf16.msra.mxu0 0
        %527 = vmatprep.subr.bf16.mxu0 0
        %528 = vmatpush2.bf16.msra.mxu0 0
        %529 = vmatprep.subr.bf16.mxu0 0
        %530 = vmatpush2.bf16.msra.mxu0 0
        %531 = vmatprep.mubr.bf16.mxu0 0
        %532 = vmatmul.mubr.bf16.gmra.mxu0 %v427
        %v533 = vpop.f32.mrf.mxu0
        %v534 = vadd.f32 %v449, %v533
        %v535 = vpop.f32.mrf.mxu0
        %v536 = vpop.f32.mrf.mxu0
        %v537 = vpop.f32.mrf.mxu0
        %538 = vdwg.mxu0
        %v539 = vld [vmem:[%s365] sm:$0xff]
        %v540 = vld [vmem:[%s365 + $0x8] sm:$0xff]
        %v541 = vld [vmem:[%s365 + $0x10] sm:$0xff]
        %v542 = vand.u32 2147483647, %v541
        %vm543 = vcmp.le.f32.partialorder %v542, 0.7853982
        %vm544 = vcmp.lt.s32.totalorder %v541, 0
        %v545 = vand.u32 %v541, 2139095040
        %v546 = vshrl.u32 %v545, 23
        %v547 = vsub.s32 %v546, 127
        %v548 = vand.u32 2147483647, %v541
        %v549 = vand.u32 %v548, 8388607
        %v550 = vor.u32 %v549, 8388608
        %v551 = vsub.s32 0, %v550
        %v552 = vadd.s32 %v547, 1
        %vm553 = vcmp.gt.s32.totalorder %v552, 0
        %v554 = vsel %vm553, %v552, 0
        %v555 = vshrl.u32 %v554, 5
        %v556 = vand.u32 %v554, 31
        %v557 = vsub.s32 32, %v556
        %v558 = vshrl.u32 683565275, %v557
        %v559 = vshll.u32 683565275, %v556
        %v560 = vshrl.u32 2475754826, %v557
        %v561 = vor.u32 %v559, %v560
        %v562 = vshll.u32 2475754826, %v556
        %v563 = vshrl.u32 2131351028, %v557
        %v564 = vor.u32 %v562, %v563
        %v565 = vshll.u32 2131351028, %v556
        %v566 = vshrl.u32 2102212464, %v557
        %v567 = vor.u32 %v565, %v566
        %v568 = vshll.u32 2102212464, %v556
        %v569 = vshrl.u32 920167782, %v557
        %v570 = vor.u32 %v568, %v569
        %v571 = vshll.u32 920167782, %v556
        %v572 = vshrl.u32 1326507024, %v557
        %v573 = vor.u32 %v571, %v572
        %vm574 = vcmp.lt.s32.totalorder %v555, 1
        %vm575 = vcmp.lt.s32.totalorder %v555, 2
        %vm576 = vcmp.lt.s32.totalorder %v555, 3
        %vm577 = vcmp.lt.s32.totalorder %v555, 4
        %v578 = vsel %vm574, %v558, %v561
        %v579 = vsel %vm577, %v567, 2102212464
        %v580 = vsel %vm576, %v564, %v579
        %v581 = vsel %vm575, %v578, %v580
        %v582 = vsel %vm574, %v561, %v564
        %v583 = vsel %vm577, %v570, 920167782
        %v584 = vsel %vm576, %v567, %v583
        %v585 = vsel %vm575, %v582, %v584
        %v586 = vsel %vm574, %v564, %v567
        %v587 = vsel %vm577, %v573, 1326507024
        %v588 = vsel %vm576, %v570, %v587
        %v589 = vsel %vm575, %v586, %v588
        %v590 = vshll.u32 %v550, 8
        %v591 = vmul.u32.u64.compose %v590, %v589
        %v592 = vextract.low.u32 %v591
        %v593 = vextract.high.u32 %v591
        %v594 = vmul.u32.u64.compose %v590, %v585
        %v595 = vextract.low.u32 %v594
        %v596 = vextract.high.u32 %v594
        %v597 = vmul.u32 %v590, %v581
        %v598 = vadd.s32 %v593, %v595
        %vm599 = vc.u32 %v593, %v595
        %v600 = vadd.s32 %v596, 1
        %v601 = vsel %vm599, %v600, %v596
        %v602 = vadd.s32 %v597, %v601
        %v603 = vadd.s32 %v602, 536870912
        %v604 = vshrl.u32 %v603, 30
        %v605 = vshll.u32 %v604, 30
        %v606 = vsub.s32 %v602, %v605
        %vm607 = vcmp.lt.s32.totalorder %v606, 0
        %v608 = vsub.s32 0, %v606
        %v609 = vsel %vm607, %v608, %v606
        %v610 = vclz %v609
        %v611 = vsub.s32 %v610, 2
        %vm612 = vcmp.gt.s32.totalorder 0, %v611
        %v613 = vsel %vm612, 0, %v611
        %v614 = vsub.s32 32, %v613
        %v615 = vshll.u32 %v606, %v613
        %v616 = vshrl.u32 %v598, %v614
        %v617 = vor.u32 %v615, %v616
        %v618 = vsub.s32 4294967266, %v613
        %v619 = vadd.s32 %v618, 127
        %v620 = vshll.u32 %v619, 23
        %v621 = vor.u32 4788187, %v620
        %v622 = vand.u32 2147483647, %v621
        %v624 = vcvt.s32.f32 %v617
        %v625 = vmul.f32 %v624, %v622
        %v626 = vxor.u32 %v625, 2147483648
        %v627 = vsel %vm544, %v626, %v625
        %v628 = vsub.s32 4, %v604
        %v629 = vsel %vm544, %v628, %v604
        %v630 = vsel %vm543, %v541, %v627
        %v631 = vsel %vm543, 0, %v629
        %v632 = vcosq.f32.pop %v630
        %v633 = vsinq.f32.pop %v630
        %vm634 = vweird.f32 %v541
        %v635 = vand.u32 %v631, 3
        %vm636 = vcmp.lt.s32.totalorder %v635, 2
        %vm637 = vcmp.eq.s32.totalorder %v635, 0
        %v638 = vxor.u32 %v633, 2147483648
        %v639 = vsel %vm637, %v632, %v638
        %vm640 = vcmp.eq.s32.totalorder %v635, 2
        %v641 = vxor.u32 %v632, 2147483648
        %v642 = vsel %vm640, %v641, %v633
        %v643 = vsel %vm636, %v639, %v642
        %v644 = vsel %vm634, nan, %v643
        %v645 = vand.u32 2147483647, %v541
        %vm646 = vcmp.le.f32.partialorder %v645, 0.7853982
        %vm647 = vcmp.lt.s32.totalorder %v541, 0
        %v648 = vand.u32 %v541, 2139095040
        %v649 = vshrl.u32 %v648, 23
        %v650 = vsub.s32 %v649, 127
        %v651 = vand.u32 2147483647, %v541
        %v652 = vand.u32 %v651, 8388607
        %v653 = vor.u32 %v652, 8388608
        %v654 = vsub.s32 0, %v653
        %v655 = vadd.s32 %v650, 1
        %vm656 = vcmp.gt.s32.totalorder %v655, 0
        %v657 = vsel %vm656, %v655, 0
        %v658 = vshrl.u32 %v657, 5
        %v659 = vand.u32 %v657, 31
        %v660 = vsub.s32 32, %v659
        %v661 = vshrl.u32 683565275, %v660
        %v662 = vshll.u32 683565275, %v659
        %v663 = vshrl.u32 2475754826, %v660
        %v664 = vor.u32 %v662, %v663
        %v665 = vshll.u32 2475754826, %v659
        %v666 = vshrl.u32 2131351028, %v660
        %v667 = vor.u32 %v665, %v666
        %v668 = vshll.u32 2131351028, %v659
        %v669 = vshrl.u32 2102212464, %v660
        %v670 = vor.u32 %v668, %v669
        %v671 = vshll.u32 2102212464, %v659
        %v672 = vshrl.u32 920167782, %v660
        %v673 = vor.u32 %v671, %v672
        %v674 = vshll.u32 920167782, %v659
        %v675 = vshrl.u32 1326507024, %v660
        %v676 = vor.u32 %v674, %v675
        %vm677 = vcmp.lt.s32.totalorder %v658, 1
        %vm678 = vcmp.lt.s32.totalorder %v658, 2
        %vm679 = vcmp.lt.s32.totalorder %v658, 3
        %vm680 = vcmp.lt.s32.totalorder %v658, 4
        %v681 = vsel %vm677, %v661, %v664
        %v682 = vsel %vm680, %v670, 2102212464
        %v683 = vsel %vm679, %v667, %v682
        %v684 = vsel %vm678, %v681, %v683
        %v685 = vsel %vm677, %v664, %v667
        %v686 = vsel %vm680, %v673, 920167782
        %v687 = vsel %vm679, %v670, %v686
        %v688 = vsel %vm678, %v685, %v687
        %v689 = vsel %vm677, %v667, %v670
        %v690 = vsel %vm680, %v676, 1326507024
        %v691 = vsel %vm679, %v673, %v690
        %v692 = vsel %vm678, %v689, %v691
        %v693 = vshll.u32 %v653, 8
        %v694 = vmul.u32.u64.compose %v693, %v692
        %v695 = vextract.low.u32 %v694
        %v696 = vextract.high.u32 %v694
        %v697 = vmul.u32.u64.compose %v693, %v688
        %v698 = vextract.low.u32 %v697
        %v699 = vextract.high.u32 %v697
        %v700 = vmul.u32 %v693, %v684
        %v701 = vadd.s32 %v696, %v698
        %vm702 = vc.u32 %v696, %v698
        %v703 = vadd.s32 %v699, 1
        %v704 = vsel %vm702, %v703, %v699
        %v705 = vadd.s32 %v700, %v704
        %v706 = vadd.s32 %v705, 536870912
        %v707 = vshrl.u32 %v706, 30
        %v708 = vshll.u32 %v707, 30
        %v709 = vsub.s32 %v705, %v708
        %vm710 = vcmp.lt.s32.totalorder %v709, 0
        %v711 = vsub.s32 0, %v709
        %v712 = vsel %vm710, %v711, %v709
        %v713 = vclz %v712
        %v714 = vsub.s32 %v713, 2
        %vm715 = vcmp.gt.s32.totalorder 0, %v714
        %v716 = vsel %vm715, 0, %v714
        %v717 = vsub.s32 32, %v716
        %v718 = vshll.u32 %v709, %v716
        %v719 = vshrl.u32 %v701, %v717
        %v720 = vor.u32 %v718, %v719
        %v721 = vsub.s32 4294967266, %v716
        %v722 = vadd.s32 %v721, 127
        %v723 = vshll.u32 %v722, 23
        %v724 = vor.u32 4788187, %v723
        %v725 = vand.u32 2147483647, %v724
        %v727 = vcvt.s32.f32 %v720
        %v728 = vmul.f32 %v727, %v725
        %v729 = vxor.u32 %v728, 2147483648
        %v730 = vsel %vm647, %v729, %v728
        %v731 = vsub.s32 4, %v707
        %v732 = vsel %vm647, %v731, %v707
        %v733 = vsel %vm646, %v541, %v730
        %v734 = vsel %vm646, 0, %v732
        %v735 = vcosq.f32.pop %v733
        %v736 = vsinq.f32.pop %v733
        %vm737 = vweird.f32 %v541
        %v738 = vadd.s32 %v734, 3
        %v739 = vand.u32 %v738, 3
        %vm740 = vcmp.lt.s32.totalorder %v739, 2
        %vm741 = vcmp.eq.s32.totalorder %v739, 0
        %v742 = vxor.u32 %v736, 2147483648
        %v743 = vsel %vm741, %v735, %v742
        %vm744 = vcmp.eq.s32.totalorder %v739, 2
        %v745 = vxor.u32 %v735, 2147483648
        %v746 = vsel %vm744, %v745, %v736
        %v747 = vsel %vm740, %v743, %v746
        %v748 = vsel %vm737, nan, %v747
        %750 = vrot.lane.b32.xlu0 %v534, 32
        %v751 = vpop.permute.xlu0 %750
        %v753 = vmul.f32 %v644, %v751
        %755 = vrot.lane.b32.xlu0 %v753, 64
        %v756 = vpop.permute.xlu0 %755
        %v758 = vadd.f32 %v534, %v756
        %759 = vrot.lane.b32.xlu0 %v534, 16
        %v760 = vpop.permute.xlu0 %759
        %v762 = vmul.f32 %v748, %v760
        %764 = vrot.lane.b32.xlu0 %v762, 64
        %v765 = vpop.permute.xlu0 %764
        %v767 = vsub.f32 %v758, %v765
        %v768 = vmul.f32 %v748, %v751
        %770 = vrot.lane.b32.xlu0 %v768, 80
        %v771 = vpop.permute.xlu0 %770
        %v773 = vadd.f32 %v534, %v771
        %v774 = vmul.f32 %v644, %v760
        %776 = vrot.lane.b32.xlu0 %v774, 80
        %v777 = vpop.permute.xlu0 %776
        %v779 = vadd.f32 %v773, %v777
        %v780 = vand.u32 2147483647, %v540
        %vm781 = vcmp.le.f32.partialorder %v780, 0.7853982
        %vm782 = vcmp.lt.s32.totalorder %v540, 0
        %v783 = vand.u32 %v540, 2139095040
        %v784 = vshrl.u32 %v783, 23
        %v785 = vsub.s32 %v784, 127
        %v786 = vand.u32 2147483647, %v540
        %v787 = vand.u32 %v786, 8388607
        %v788 = vor.u32 %v787, 8388608
        %v789 = vsub.s32 0, %v788
        %v790 = vadd.s32 %v785, 1
        %vm791 = vcmp.gt.s32.totalorder %v790, 0
        %v792 = vsel %vm791, %v790, 0
        %v793 = vshrl.u32 %v792, 5
        %v794 = vand.u32 %v792, 31
        %v795 = vsub.s32 32, %v794
        %v796 = vshrl.u32 683565275, %v795
        %v797 = vshll.u32 683565275, %v794
        %v798 = vshrl.u32 2475754826, %v795
        %v799 = vor.u32 %v797, %v798
        %v800 = vshll.u32 2475754826, %v794
        %v801 = vshrl.u32 2131351028, %v795
        %v802 = vor.u32 %v800, %v801
        %v803 = vshll.u32 2131351028, %v794
        %v804 = vshrl.u32 2102212464, %v795
        %v805 = vor.u32 %v803, %v804
        %v806 = vshll.u32 2102212464, %v794
        %v807 = vshrl.u32 920167782, %v795
        %v808 = vor.u32 %v806, %v807
        %v809 = vshll.u32 920167782, %v794
        %v810 = vshrl.u32 1326507024, %v795
        %v811 = vor.u32 %v809, %v810
        %vm812 = vcmp.lt.s32.totalorder %v793, 1
        %vm813 = vcmp.lt.s32.totalorder %v793, 2
        %vm814 = vcmp.lt.s32.totalorder %v793, 3
        %vm815 = vcmp.lt.s32.totalorder %v793, 4
        %v816 = vsel %vm812, %v796, %v799
        %v817 = vsel %vm815, %v805, 2102212464
        %v818 = vsel %vm814, %v802, %v817
        %v819 = vsel %vm813, %v816, %v818
        %v820 = vsel %vm812, %v799, %v802
        %v821 = vsel %vm815, %v808, 920167782
        %v822 = vsel %vm814, %v805, %v821
        %v823 = vsel %vm813, %v820, %v822
        %v824 = vsel %vm812, %v802, %v805
        %v825 = vsel %vm815, %v811, 1326507024
        %v826 = vsel %vm814, %v808, %v825
        %v827 = vsel %vm813, %v824, %v826
        %v828 = vshll.u32 %v788, 8
        %v829 = vmul.u32.u64.compose %v828, %v827
        %v830 = vextract.low.u32 %v829
        %v831 = vextract.high.u32 %v829
        %v832 = vmul.u32.u64.compose %v828, %v823
        %v833 = vextract.low.u32 %v832
        %v834 = vextract.high.u32 %v832
        %v835 = vmul.u32 %v828, %v819
        %v836 = vadd.s32 %v831, %v833
        %vm837 = vc.u32 %v831, %v833
        %v838 = vadd.s32 %v834, 1
        %v839 = vsel %vm837, %v838, %v834
        %v840 = vadd.s32 %v835, %v839
        %v841 = vadd.s32 %v840, 536870912
        %v842 = vshrl.u32 %v841, 30
        %v843 = vshll.u32 %v842, 30
        %v844 = vsub.s32 %v840, %v843
        %vm845 = vcmp.lt.s32.totalorder %v844, 0
        %v846 = vsub.s32 0, %v844
        %v847 = vsel %vm845, %v846, %v844
        %v848 = vclz %v847
        %v849 = vsub.s32 %v848, 2
        %vm850 = vcmp.gt.s32.totalorder 0, %v849
        %v851 = vsel %vm850, 0, %v849
        %v852 = vsub.s32 32, %v851
        %v853 = vshll.u32 %v844, %v851
        %v854 = vshrl.u32 %v836, %v852
        %v855 = vor.u32 %v853, %v854
        %v856 = vsub.s32 4294967266, %v851
        %v857 = vadd.s32 %v856, 127
        %v858 = vshll.u32 %v857, 23
        %v859 = vor.u32 4788187, %v858
        %v860 = vand.u32 2147483647, %v859
        %v862 = vcvt.s32.f32 %v855
        %v863 = vmul.f32 %v862, %v860
        %v864 = vxor.u32 %v863, 2147483648
        %v865 = vsel %vm782, %v864, %v863
        %v866 = vsub.s32 4, %v842
        %v867 = vsel %vm782, %v866, %v842
        %v868 = vsel %vm781, %v540, %v865
        %v869 = vsel %vm781, 0, %v867
        %v870 = vcosq.f32.pop %v868
        %v871 = vsinq.f32.pop %v868
        %vm872 = vweird.f32 %v540
        %v873 = vand.u32 %v869, 3
        %vm874 = vcmp.lt.s32.totalorder %v873, 2
        %vm875 = vcmp.eq.s32.totalorder %v873, 0
        %v876 = vxor.u32 %v871, 2147483648
        %v877 = vsel %vm875, %v870, %v876
        %vm878 = vcmp.eq.s32.totalorder %v873, 2
        %v879 = vxor.u32 %v870, 2147483648
        %v880 = vsel %vm878, %v879, %v871
        %v881 = vsel %vm874, %v877, %v880
        %v882 = vsel %vm872, nan, %v881
        %v883 = vand.u32 2147483647, %v540
        %vm884 = vcmp.le.f32.partialorder %v883, 0.7853982
        %vm885 = vcmp.lt.s32.totalorder %v540, 0
        %v886 = vand.u32 %v540, 2139095040
        %v887 = vshrl.u32 %v886, 23
        %v888 = vsub.s32 %v887, 127
        %v889 = vand.u32 2147483647, %v540
        %v890 = vand.u32 %v889, 8388607
        %v891 = vor.u32 %v890, 8388608
        %v892 = vsub.s32 0, %v891
        %v893 = vadd.s32 %v888, 1
        %vm894 = vcmp.gt.s32.totalorder %v893, 0
        %v895 = vsel %vm894, %v893, 0
        %v896 = vshrl.u32 %v895, 5
        %v897 = vand.u32 %v895, 31
        %v898 = vsub.s32 32, %v897
        %v899 = vshrl.u32 683565275, %v898
        %v900 = vshll.u32 683565275, %v897
        %v901 = vshrl.u32 2475754826, %v898
        %v902 = vor.u32 %v900, %v901
        %v903 = vshll.u32 2475754826, %v897
        %v904 = vshrl.u32 2131351028, %v898
        %v905 = vor.u32 %v903, %v904
        %v906 = vshll.u32 2131351028, %v897
        %v907 = vshrl.u32 2102212464, %v898
        %v908 = vor.u32 %v906, %v907
        %v909 = vshll.u32 2102212464, %v897
        %v910 = vshrl.u32 920167782, %v898
        %v911 = vor.u32 %v909, %v910
        %v912 = vshll.u32 920167782, %v897
        %v913 = vshrl.u32 1326507024, %v898
        %v914 = vor.u32 %v912, %v913
        %vm915 = vcmp.lt.s32.totalorder %v896, 1
        %vm916 = vcmp.lt.s32.totalorder %v896, 2
        %vm917 = vcmp.lt.s32.totalorder %v896, 3
        %vm918 = vcmp.lt.s32.totalorder %v896, 4
        %v919 = vsel %vm915, %v899, %v902
        %v920 = vsel %vm918, %v908, 2102212464
        %v921 = vsel %vm917, %v905, %v920
        %v922 = vsel %vm916, %v919, %v921
        %v923 = vsel %vm915, %v902, %v905
        %v924 = vsel %vm918, %v911, 920167782
        %v925 = vsel %vm917, %v908, %v924
        %v926 = vsel %vm916, %v923, %v925
        %v927 = vsel %vm915, %v905, %v908
        %v928 = vsel %vm918, %v914, 1326507024
        %v929 = vsel %vm917, %v911, %v928
        %v930 = vsel %vm916, %v927, %v929
        %v931 = vshll.u32 %v891, 8
        %v932 = vmul.u32.u64.compose %v931, %v930
        %v933 = vextract.low.u32 %v932
        %v934 = vextract.high.u32 %v932
        %v935 = vmul.u32.u64.compose %v931, %v926
        %v936 = vextract.low.u32 %v935
        %v937 = vextract.high.u32 %v935
        %v938 = vmul.u32 %v931, %v922
        %v939 = vadd.s32 %v934, %v936
        %vm940 = vc.u32 %v934, %v936
        %v941 = vadd.s32 %v937, 1
        %v942 = vsel %vm940, %v941, %v937
        %v943 = vadd.s32 %v938, %v942
        %v944 = vadd.s32 %v943, 536870912
        %v945 = vshrl.u32 %v944, 30
        %v946 = vshll.u32 %v945, 30
        %v947 = vsub.s32 %v943, %v946
        %vm948 = vcmp.lt.s32.totalorder %v947, 0
        %v949 = vsub.s32 0, %v947
        %v950 = vsel %vm948, %v949, %v947
        %v951 = vclz %v950
        %v952 = vsub.s32 %v951, 2
        %vm953 = vcmp.gt.s32.totalorder 0, %v952
        %v954 = vsel %vm953, 0, %v952
        %v955 = vsub.s32 32, %v954
        %v956 = vshll.u32 %v947, %v954
        %v957 = vshrl.u32 %v939, %v955
        %v958 = vor.u32 %v956, %v957
        %v959 = vsub.s32 4294967266, %v954
        %v960 = vadd.s32 %v959, 127
        %v961 = vshll.u32 %v960, 23
        %v962 = vor.u32 4788187, %v961
        %v963 = vand.u32 2147483647, %v962
        %v965 = vcvt.s32.f32 %v958
        %v966 = vmul.f32 %v965, %v963
        %v967 = vxor.u32 %v966, 2147483648
        %v968 = vsel %vm885, %v967, %v966
        %v969 = vsub.s32 4, %v945
        %v970 = vsel %vm885, %v969, %v945
        %v971 = vsel %vm884, %v540, %v968
        %v972 = vsel %vm884, 0, %v970
        %v973 = vcosq.f32.pop %v971
        %v974 = vsinq.f32.pop %v971
        %vm975 = vweird.f32 %v540
        %v976 = vadd.s32 %v972, 3
        %v977 = vand.u32 %v976, 3
        %vm978 = vcmp.lt.s32.totalorder %v977, 2
        %vm979 = vcmp.eq.s32.totalorder %v977, 0
        %v980 = vxor.u32 %v974, 2147483648
        %v981 = vsel %vm979, %v973, %v980
        %vm982 = vcmp.eq.s32.totalorder %v977, 2
        %v983 = vxor.u32 %v973, 2147483648
        %v984 = vsel %vm982, %v983, %v974
        %v985 = vsel %vm978, %v981, %v984
        %v986 = vsel %vm975, nan, %v985
        %987 = vrot.lane.b32.xlu0 %v534, 64
        %v988 = vpop.permute.xlu0 %987
        %v990 = vmul.f32 %v882, %v988
        %992 = vrot.lane.b32.xlu0 %v990, 32
        %v993 = vpop.permute.xlu0 %992
        %v995 = vadd.f32 %v534, %v993
        %996 = vrot.lane.b32.xlu0 %v534, 48
        %v997 = vpop.permute.xlu0 %996
        %v999 = vmul.f32 %v986, %v997
        %1001 = vrot.lane.b32.xlu0 %v999, 32
        %v1002 = vpop.permute.xlu0 %1001
        %v1004 = vsub.f32 %v995, %v1002
        %v1005 = vmul.f32 %v986, %v988
        %1007 = vrot.lane.b32.xlu0 %v1005, 48
        %v1008 = vpop.permute.xlu0 %1007
        %v1010 = vadd.f32 %v534, %v1008
        %v1011 = vmul.f32 %v882, %v997
        %1013 = vrot.lane.b32.xlu0 %v1011, 48
        %v1014 = vpop.permute.xlu0 %1013
        %v1016 = vadd.f32 %v1010, %v1014
        %1018 = vrot.lane.b32.xlu0 %v767, 64
        %v1019 = vpop.permute.xlu0 %1018
        %v1021 = vmul.f32 %v882, %v1019
        %1023 = vrot.lane.b32.xlu0 %v1021, 32
        %v1024 = vpop.permute.xlu0 %1023
        %v1026 = vadd.f32 %v534, %v1024
        %1028 = vrot.lane.b32.xlu0 %v779, 48
        %v1029 = vpop.permute.xlu0 %1028
        %v1031 = vmul.f32 %v986, %v1029
        %1033 = vrot.lane.b32.xlu0 %v1031, 32
        %v1034 = vpop.permute.xlu0 %1033
        %v1036 = vsub.f32 %v1026, %v1034
        %v1037 = vmul.f32 %v986, %v1019
        %1039 = vrot.lane.b32.xlu0 %v1037, 48
        %v1040 = vpop.permute.xlu0 %1039
        %v1042 = vadd.f32 %v534, %v1040
        %v1043 = vmul.f32 %v882, %v1029
        %1045 = vrot.lane.b32.xlu0 %v1043, 48
        %v1046 = vpop.permute.xlu0 %1045
        %v1048 = vadd.f32 %v1042, %v1046
        %v1049 = vand.u32 2147483647, %v539
        %vm1050 = vcmp.le.f32.partialorder %v1049, 0.7853982
        %vm1051 = vcmp.lt.s32.totalorder %v539, 0
        %v1052 = vand.u32 %v539, 2139095040
        %v1053 = vshrl.u32 %v1052, 23
        %v1054 = vsub.s32 %v1053, 127
        %v1055 = vand.u32 2147483647, %v539
        %v1056 = vand.u32 %v1055, 8388607
        %v1057 = vor.u32 %v1056, 8388608
        %v1058 = vsub.s32 0, %v1057
        %v1059 = vadd.s32 %v1054, 1
        %vm1060 = vcmp.gt.s32.totalorder %v1059, 0
        %v1061 = vsel %vm1060, %v1059, 0
        %v1062 = vshrl.u32 %v1061, 5
        %v1063 = vand.u32 %v1061, 31
        %v1064 = vsub.s32 32, %v1063
        %v1065 = vshrl.u32 683565275, %v1064
        %v1066 = vshll.u32 683565275, %v1063
        %v1067 = vshrl.u32 2475754826, %v1064
        %v1068 = vor.u32 %v1066, %v1067
        %v1069 = vshll.u32 2475754826, %v1063
        %v1070 = vshrl.u32 2131351028, %v1064
        %v1071 = vor.u32 %v1069, %v1070
        %v1072 = vshll.u32 2131351028, %v1063
        %v1073 = vshrl.u32 2102212464, %v1064
        %v1074 = vor.u32 %v1072, %v1073
        %v1075 = vshll.u32 2102212464, %v1063
        %v1076 = vshrl.u32 920167782, %v1064
        %v1077 = vor.u32 %v1075, %v1076
        %v1078 = vshll.u32 920167782, %v1063
        %v1079 = vshrl.u32 1326507024, %v1064
        %v1080 = vor.u32 %v1078, %v1079
        %vm1081 = vcmp.lt.s32.totalorder %v1062, 1
        %vm1082 = vcmp.lt.s32.totalorder %v1062, 2
        %vm1083 = vcmp.lt.s32.totalorder %v1062, 3
        %vm1084 = vcmp.lt.s32.totalorder %v1062, 4
        %v1085 = vsel %vm1081, %v1065, %v1068
        %v1086 = vsel %vm1084, %v1074, 2102212464
        %v1087 = vsel %vm1083, %v1071, %v1086
        %v1088 = vsel %vm1082, %v1085, %v1087
        %v1089 = vsel %vm1081, %v1068, %v1071
        %v1090 = vsel %vm1084, %v1077, 920167782
        %v1091 = vsel %vm1083, %v1074, %v1090
        %v1092 = vsel %vm1082, %v1089, %v1091
        %v1093 = vsel %vm1081, %v1071, %v1074
        %v1094 = vsel %vm1084, %v1080, 1326507024
        %v1095 = vsel %vm1083, %v1077, %v1094
        %v1096 = vsel %vm1082, %v1093, %v1095
        %v1097 = vshll.u32 %v1057, 8
        %v1098 = vmul.u32.u64.compose %v1097, %v1096
        %v1099 = vextract.low.u32 %v1098
        %v1100 = vextract.high.u32 %v1098
        %v1101 = vmul.u32.u64.compose %v1097, %v1092
        %v1102 = vextract.low.u32 %v1101
        %v1103 = vextract.high.u32 %v1101
        %v1104 = vmul.u32 %v1097, %v1088
        %v1105 = vadd.s32 %v1100, %v1102
        %vm1106 = vc.u32 %v1100, %v1102
        %v1107 = vadd.s32 %v1103, 1
        %v1108 = vsel %vm1106, %v1107, %v1103
        %v1109 = vadd.s32 %v1104, %v1108
        %v1110 = vadd.s32 %v1109, 536870912
        %v1111 = vshrl.u32 %v1110, 30
        %v1112 = vshll.u32 %v1111, 30
        %v1113 = vsub.s32 %v1109, %v1112
        %vm1114 = vcmp.lt.s32.totalorder %v1113, 0
        %v1115 = vsub.s32 0, %v1113
        %v1116 = vsel %vm1114, %v1115, %v1113
        %v1117 = vclz %v1116
        %v1118 = vsub.s32 %v1117, 2
        %vm1119 = vcmp.gt.s32.totalorder 0, %v1118
        %v1120 = vsel %vm1119, 0, %v1118
        %v1121 = vsub.s32 32, %v1120
        %v1122 = vshll.u32 %v1113, %v1120
        %v1123 = vshrl.u32 %v1105, %v1121
        %v1124 = vor.u32 %v1122, %v1123
        %v1125 = vsub.s32 4294967266, %v1120
        %v1126 = vadd.s32 %v1125, 127
        %v1127 = vshll.u32 %v1126, 23
        %v1128 = vor.u32 4788187, %v1127
        %v1129 = vand.u32 2147483647, %v1128
        %v1131 = vcvt.s32.f32 %v1124
        %v1132 = vmul.f32 %v1131, %v1129
        %v1133 = vxor.u32 %v1132, 2147483648
        %v1134 = vsel %vm1051, %v1133, %v1132
        %v1135 = vsub.s32 4, %v1111
        %v1136 = vsel %vm1051, %v1135, %v1111
        %v1137 = vsel %vm1050, %v539, %v1134
        %v1138 = vsel %vm1050, 0, %v1136
        %v1139 = vcosq.f32.pop %v1137
        %v1140 = vsinq.f32.pop %v1137
        %vm1141 = vweird.f32 %v539
        %v1142 = vand.u32 %v1138, 3
        %vm1143 = vcmp.lt.s32.totalorder %v1142, 2
        %vm1144 = vcmp.eq.s32.totalorder %v1142, 0
        %v1145 = vxor.u32 %v1140, 2147483648
        %v1146 = vsel %vm1144, %v1139, %v1145
        %vm1147 = vcmp.eq.s32.totalorder %v1142, 2
        %v1148 = vxor.u32 %v1139, 2147483648
        %v1149 = vsel %vm1147, %v1148, %v1140
        %v1150 = vsel %vm1143, %v1146, %v1149
        %v1151 = vsel %vm1141, nan, %v1150
        %v1152 = vand.u32 2147483647, %v539
        %vm1153 = vcmp.le.f32.partialorder %v1152, 0.7853982
        %vm1154 = vcmp.lt.s32.totalorder %v539, 0
        %v1155 = vand.u32 %v539, 2139095040
        %v1156 = vshrl.u32 %v1155, 23
        %v1157 = vsub.s32 %v1156, 127
        %v1158 = vand.u32 2147483647, %v539
        %v1159 = vand.u32 %v1158, 8388607
        %v1160 = vor.u32 %v1159, 8388608
        %v1161 = vsub.s32 0, %v1160
        %v1162 = vadd.s32 %v1157, 1
        %vm1163 = vcmp.gt.s32.totalorder %v1162, 0
        %v1164 = vsel %vm1163, %v1162, 0
        %v1165 = vshrl.u32 %v1164, 5
        %v1166 = vand.u32 %v1164, 31
        %v1167 = vsub.s32 32, %v1166
        %v1168 = vshrl.u32 683565275, %v1167
        %v1169 = vshll.u32 683565275, %v1166
        %v1170 = vshrl.u32 2475754826, %v1167
        %v1171 = vor.u32 %v1169, %v1170
        %v1172 = vshll.u32 2475754826, %v1166
        %v1173 = vshrl.u32 2131351028, %v1167
        %v1174 = vor.u32 %v1172, %v1173
        %v1175 = vshll.u32 2131351028, %v1166
        %v1176 = vshrl.u32 2102212464, %v1167
        %v1177 = vor.u32 %v1175, %v1176
        %v1178 = vshll.u32 2102212464, %v1166
        %v1179 = vshrl.u32 920167782, %v1167
        %v1180 = vor.u32 %v1178, %v1179
        %v1181 = vshll.u32 920167782, %v1166
        %v1182 = vshrl.u32 1326507024, %v1167
        %v1183 = vor.u32 %v1181, %v1182
        %vm1184 = vcmp.lt.s32.totalorder %v1165, 1
        %vm1185 = vcmp.lt.s32.totalorder %v1165, 2
        %vm1186 = vcmp.lt.s32.totalorder %v1165, 3
        %vm1187 = vcmp.lt.s32.totalorder %v1165, 4
        %v1188 = vsel %vm1184, %v1168, %v1171
        %v1189 = vsel %vm1187, %v1177, 2102212464
        %v1190 = vsel %vm1186, %v1174, %v1189
        %v1191 = vsel %vm1185, %v1188, %v1190
        %v1192 = vsel %vm1184, %v1171, %v1174
        %v1193 = vsel %vm1187, %v1180, 920167782
        %v1194 = vsel %vm1186, %v1177, %v1193
        %v1195 = vsel %vm1185, %v1192, %v1194
        %v1196 = vsel %vm1184, %v1174, %v1177
        %v1197 = vsel %vm1187, %v1183, 1326507024
        %v1198 = vsel %vm1186, %v1180, %v1197
        %v1199 = vsel %vm1185, %v1196, %v1198
        %v1200 = vshll.u32 %v1160, 8
        %v1201 = vmul.u32.u64.compose %v1200, %v1199
        %v1202 = vextract.low.u32 %v1201
        %v1203 = vextract.high.u32 %v1201
        %v1204 = vmul.u32.u64.compose %v1200, %v1195
        %v1205 = vextract.low.u32 %v1204
        %v1206 = vextract.high.u32 %v1204
        %v1207 = vmul.u32 %v1200, %v1191
        %v1208 = vadd.s32 %v1203, %v1205
        %vm1209 = vc.u32 %v1203, %v1205
        %v1210 = vadd.s32 %v1206, 1
        %v1211 = vsel %vm1209, %v1210, %v1206
        %v1212 = vadd.s32 %v1207, %v1211
        %v1213 = vadd.s32 %v1212, 536870912
        %v1214 = vshrl.u32 %v1213, 30
        %v1215 = vshll.u32 %v1214, 30
        %v1216 = vsub.s32 %v1212, %v1215
        %vm1217 = vcmp.lt.s32.totalorder %v1216, 0
        %v1218 = vsub.s32 0, %v1216
        %v1219 = vsel %vm1217, %v1218, %v1216
        %v1220 = vclz %v1219
        %v1221 = vsub.s32 %v1220, 2
        %vm1222 = vcmp.gt.s32.totalorder 0, %v1221
        %v1223 = vsel %vm1222, 0, %v1221
        %v1224 = vsub.s32 32, %v1223
        %v1225 = vshll.u32 %v1216, %v1223
        %v1226 = vshrl.u32 %v1208, %v1224
        %v1227 = vor.u32 %v1225, %v1226
        %v1228 = vsub.s32 4294967266, %v1223
        %v1229 = vadd.s32 %v1228, 127
        %v1230 = vshll.u32 %v1229, 23
        %v1231 = vor.u32 4788187, %v1230
        %v1232 = vand.u32 2147483647, %v1231
        %v1234 = vcvt.s32.f32 %v1227
        %v1235 = vmul.f32 %v1234, %v1232
        %v1236 = vxor.u32 %v1235, 2147483648
        %v1237 = vsel %vm1154, %v1236, %v1235
        %v1238 = vsub.s32 4, %v1214
        %v1239 = vsel %vm1154, %v1238, %v1214
        %v1240 = vsel %vm1153, %v539, %v1237
        %v1241 = vsel %vm1153, 0, %v1239
        %v1242 = vcosq.f32.pop %v1240
        %v1243 = vsinq.f32.pop %v1240
        %vm1244 = vweird.f32 %v539
        %v1245 = vadd.s32 %v1241, 3
        %v1246 = vand.u32 %v1245, 3
        %vm1247 = vcmp.lt.s32.totalorder %v1246, 2
        %vm1248 = vcmp.eq.s32.totalorder %v1246, 0
        %v1249 = vxor.u32 %v1243, 2147483648
        %v1250 = vsel %vm1248, %v1242, %v1249
        %vm1251 = vcmp.eq.s32.totalorder %v1246, 2
        %v1252 = vxor.u32 %v1242, 2147483648
        %v1253 = vsel %vm1251, %v1252, %v1243
        %v1254 = vsel %vm1247, %v1250, %v1253
        %v1255 = vsel %vm1244, nan, %v1254
        %1256 = vrot.lane.b32.xlu0 %v534, 96
        %v1257 = vpop.permute.xlu0 %1256
        %v1259 = vmul.f32 %v1151, %v1257
        %v1260 = vadd.f32 %v534, %v1259
        %1261 = vrot.lane.b32.xlu0 %v534, 80
        %v1262 = vpop.permute.xlu0 %1261
        %v1264 = vmul.f32 %v1255, %v1262
        %v1265 = vsub.f32 %v1260, %v1264
        %v1266 = vmul.f32 %v1255, %v1257
        %1268 = vrot.lane.b32.xlu0 %v1266, 16
        %v1269 = vpop.permute.xlu0 %1268
        %v1271 = vadd.f32 %v534, %v1269
        %v1272 = vmul.f32 %v1151, %v1262
        %1274 = vrot.lane.b32.xlu0 %v1272, 16
        %v1275 = vpop.permute.xlu0 %1274
        %v1277 = vadd.f32 %v1271, %v1275
        %1279 = vrot.lane.b32.xlu0 %v1004, 96
        %v1280 = vpop.permute.xlu0 %1279
        %v1282 = vmul.f32 %v1151, %v1280
        %v1283 = vadd.f32 %v534, %v1282
        %1285 = vrot.lane.b32.xlu0 %v1016, 80
        %v1286 = vpop.permute.xlu0 %1285
        %v1288 = vmul.f32 %v1255, %v1286
        %v1289 = vsub.f32 %v1283, %v1288
        %v1290 = vmul.f32 %v1255, %v1280
        %1292 = vrot.lane.b32.xlu0 %v1290, 16
        %v1293 = vpop.permute.xlu0 %1292
        %v1295 = vadd.f32 %v534, %v1293
        %v1296 = vmul.f32 %v1151, %v1286
        %1298 = vrot.lane.b32.xlu0 %v1296, 16
        %v1299 = vpop.permute.xlu0 %1298
        %v1301 = vadd.f32 %v1295, %v1299
        %1303 = vrot.lane.b32.xlu0 %v1036, 96
        %v1304 = vpop.permute.xlu0 %1303
        %v1306 = vmul.f32 %v1151, %v1304
        %v1307 = vadd.f32 %v534, %v1306
        %1309 = vrot.lane.b32.xlu0 %v1048, 80
        %v1310 = vpop.permute.xlu0 %1309
        %v1312 = vmul.f32 %v1255, %v1310
        %v1313 = vsub.f32 %v1307, %v1312
        %v1314 = vmul.f32 %v1255, %v1304
        %1316 = vrot.lane.b32.xlu0 %v1314, 16
        %v1317 = vpop.permute.xlu0 %1316
        %v1319 = vadd.f32 %v534, %v1317
        %v1320 = vmul.f32 %v1151, %v1310
        %1322 = vrot.lane.b32.xlu0 %v1320, 16
        %v1323 = vpop.permute.xlu0 %1322
        %v1325 = vadd.f32 %v1319, %v1323
        %vm1326 = vcmask 130048
        %v1327 = vsel %vm1326, %v1265, %v1277
        %v1328 = vmul.f32 %v1327, 0.5
        %v1329 = vsel %vm1326, %v1289, %v1301
        %v1330 = vmul.f32 %v1329, 0.33333334
        %v1331 = vsel %vm1326, %v1313, %v1325
        %v1332 = vmul.f32 %v1331, 0.25
        %1334 = vrot.lane.b32.xlu0 %v1328, 32
        %v1335 = vpop.permute.xlu0 %1334
        %vm1337 = vcmask 261120
        %v1338 = vsel %vm1337, %v534, %v1335
        %1340 = vrot.lane.b32.xlu0 %v1330, 32
        %v1341 = vpop.permute.xlu0 %1340
        %v1343 = vsel %vm1337, %v534, %v1341
        %1345 = vrot.lane.b32.xlu0 %v1332, 32
        %v1346 = vpop.permute.xlu0 %1345
        %v1348 = vsel %vm1337, %v534, %v1346
        %v1349 = vpack.c.bf16 %v1343, %v1338
        %v1350 = vpack.c.bf16 %v1348, %v1348
        %v1351 = vld [vmem:[#allocation10] sm:$0xf]
        %v1352 = vld [vmem:[#allocation10 + $0x4] sm:$0xf]
        %v1353 = vld [vmem:[#allocation10 + $0x8] sm:$0xf]
        %v1354 = vld [vmem:[#allocation10 + $0xc] sm:$0xf]
        %v1355 = vld [vmem:[#allocation10 + $0x10] sm:$0xf]
        %v1356 = vld [vmem:[#allocation10 + $0x14] sm:$0xf]
        %v1357 = vld [vmem:[#allocation10 + $0x18] sm:$0xf]
        %v1358 = vld [vmem:[#allocation10 + $0x1c] sm:$0xf]
        %v1359 = vld [vmem:[%s6] sm:$0x1]
        %v1361 = vlaneseq
        %v1362 = vshrl.u32 %v1361, 7
        %v1363 = vsub.s32 0, %v1362
        %v1364 = vrot.slane %v1359, %v1363
        %v1374 = vunpack.c.l.b16 %v1351
        %v1375 = vunpack.c.l.b16 %v1352
        %v1376 = vunpack.c.l.b16 %v1353
        %v1377 = vunpack.c.l.b16 %v1354
        %v1378 = vunpack.c.l.b16 %v1355
        %v1379 = vunpack.c.l.b16 %v1356
        %v1380 = vunpack.c.l.b16 %v1357
        %v1381 = vunpack.c.l.b16 %v1358
        %v1382 = vpack.c.b16 %v1375, %v1374
        %v1383 = vpack.c.b16 %v1377, %v1376
        %v1384 = vpack.c.b16 %v1379, %v1378
        %v1385 = vpack.c.b16 %v1381, %v1380
        %vm1390 = vcmask 523264
        %v1392 = vsel %vm1390, %v1349, 0
        %v1395 = vsel %vm1390, %v1350, 0
        %1397 = vmatprep.subr.bf16.mxu0 0
        %1398 = vmatpush1.bf16.msra.mxu0 0
        %1399 = vmatprep.subr.bf16.mxu0 0
        %1400 = vmatpush1.bf16.msra.mxu0 0
        %1401 = vmatprep.subr.bf16.mxu0 0
        %1402 = vmatpush1.bf16.msra.mxu0 0
        %1403 = vmatprep.subr.bf16.mxu0 0
        %1404 = vmatpush1.bf16.msra.mxu0 0
        %1405 = vmatprep.subr.bf16.mxu0 0
        %1406 = vmatpush1.bf16.msra.mxu0 %v1385
        %1407 = vmatprep.subr.bf16.mxu0 0
        %1408 = vmatpush1.bf16.msra.mxu0 %v1384
        %1409 = vmatprep.subr.bf16.mxu0 0
        %1410 = vmatpush1.bf16.msra.mxu0 %v1383
        %1411 = vmatprep.subr.bf16.mxu0 0
        %1412 = vmatpush1.bf16.msra.mxu0 %v1382
        %1413 = vmatprep.subr.bf16.mxu0 0
        %1414 = vmatpush2.bf16.msra.mxu0 0
        %1415 = vmatprep.subr.bf16.mxu0 0
        %1416 = vmatpush2.bf16.msra.mxu0 0
        %1417 = vmatprep.subr.bf16.mxu0 0
        %1418 = vmatpush2.bf16.msra.mxu0 0
        %1419 = vmatprep.subr.bf16.mxu0 0
        %1420 = vmatpush2.bf16.msra.mxu0 0
        %1421 = vmatprep.subr.bf16.mxu0 0
        %1422 = vmatpush2.bf16.msra.mxu0 0
        %1423 = vmatprep.subr.bf16.mxu0 0
        %1424 = vmatpush2.bf16.msra.mxu0 0
        %1425 = vmatprep.subr.bf16.mxu0 0
        %1426 = vmatpush2.bf16.msra.mxu0 0
        %1427 = vmatprep.subr.bf16.mxu0 0
        %1428 = vmatpush2.bf16.msra.mxu0 0
        %1429 = vmatprep.mubr.bf16.mxu0 0
        %1430 = vmatmul.mubr.bf16.gmra.mxu0 %v1392
        %v1431 = vpop.f32.mrf.mxu0
        %v1432 = vadd.f32 %v1364, %v1431
        %v1433 = vpop.f32.mrf.mxu0
        %v1434 = vpop.f32.mrf.mxu0
        %v1435 = vadd.f32 %v1364, %v1434
        %v1436 = vpop.f32.mrf.mxu0
        %1437 = vmatprep.mubr.bf16.mxu0 0
        %1438 = vmatmul.mubr.bf16.gmra.mxu0 %v1395
        %v1439 = vpop.f32.mrf.mxu0
        %v1440 = vadd.f32 %v1364, %v1439
        %v1441 = vpop.f32.mrf.mxu0
        %v1442 = vpop.f32.mrf.mxu0
        %v1443 = vpop.f32.mrf.mxu0
        %1444 = vdwg.mxu0
        %v1445 = vtanh.pop %v1432
        %v1446 = vtanh.pop %v1435
        %v1447 = vtanh.pop %v1440
        %v1448 = vld [vmem:[%s7] sm:$0x1]
        %v1450 = vlaneseq
        %v1451 = vshrl.u32 %v1450, 7
        %v1452 = vsub.s32 0, %v1451
        %v1453 = vrot.slane %v1448, %v1452
        %v1455 = vmul.f32 %v1445, %v1453
        %v1456 = vmul.f32 %v1446, %v1453
        %v1457 = vmul.f32 %v1447, %v1453
        %v1458 = vsel %vm1390, %v1455, 0.0
        %1459 = vadd.xlane.f32.xlu0 %v1458
        %v1460 = vpop.xlane.xlu0 %1459
        %v1461 = vsel %vm1390, %v1456, 0.0
        %1462 = vadd.xlane.f32.xlu0 %v1461
        %v1463 = vpop.xlane.xlu0 %1462
        %v1464 = vsel %vm1390, %v1457, 0.0
        %1465 = vadd.xlane.f32.xlu0 %v1464
        %v1466 = vpop.xlane.xlu0 %1465
        %p1467 = scmp.gt.s32.totalorder %s426, 1
        %s1468 = scalar_select %p1467, 1, 0
        %s1469 = scvt.s32.f32 %s1468
        %v1470 = vstv %s1469
        %v1471 = vmul.f32 %v1460, %v1470
        %s1472 = ssub.f32 %s1469, 1.0
        %s1473 = smul.f32 %s1472, 1e+30
        %v1474 = vstv %s1473
        %v1475 = vadd.f32 %v1471, %v1474
        %p1476 = scmp.gt.s32.totalorder %s426, 2
        %s1477 = scalar_select %p1476, 1, 0
        %s1478 = scvt.s32.f32 %s1477
        %v1479 = vstv %s1478
        %v1480 = vmul.f32 %v1463, %v1479
        %s1481 = ssub.f32 %s1478, 1.0
        %s1482 = smul.f32 %s1481, 1e+30
        %v1483 = vstv %s1482
        %v1484 = vadd.f32 %v1480, %v1483
        %p1485 = scmp.gt.s32.totalorder %s426, 3
        %s1486 = scalar_select %p1485, 1, 0
        %s1487 = scvt.s32.f32 %s1486
        %v1488 = vstv %s1487
        %v1489 = vmul.f32 %v1466, %v1488
        %s1490 = ssub.f32 %s1487, 1.0
        %s1491 = smul.f32 %s1490, 1e+30
        %v1492 = vstv %s1491
        %v1493 = vadd.f32 %v1489, %v1492
        %v1494 = vmax.f32 %v1475, %v1484
        %v1495 = vmax.f32 %v1494, %v1493
        %v1496 = vsub.f32 %v1475, %v1495
        %v1497 = vmul.f32 %v1496, 1.442695
        %v1498 = vpow.pop %v1497
        %v1499 = vsub.f32 %v1484, %v1495
        %v1500 = vmul.f32 %v1499, 1.442695
        %v1501 = vpow.pop %v1500
        %v1502 = vsub.f32 %v1493, %v1495
        %v1503 = vmul.f32 %v1502, 1.442695
        %v1504 = vpow.pop %v1503
        %v1505 = vadd.f32 %v1498, %v1501
        %v1506 = vadd.f32 %v1505, %v1504
        %v1507 = vrcp.pop %v1506
        %v1508 = vmul.f32 %v1498, %v1507
        %v1509 = vmul.f32 %v1338, %v1508
        %v1510 = vmul.f32 %v1501, %v1507
        %v1511 = vmul.f32 %v1343, %v1510
        %v1512 = vadd.f32 %v1509, %v1511
        %v1513 = vmul.f32 %v1504, %v1507
        %v1514 = vmul.f32 %v1348, %v1513
        %v1515 = vadd.f32 %v1512, %v1514
        %v1516 = vmax.f32 %v1515, 0.0
        %1517 = vst.msk [vmem:[%s421] sm:$0xff] %vm1390, %v1516
        %s1518 = sand.u32 %s226, 1
        %s1519 = scalar_lea.sflag [#allocation6], %s1518
        %s1520 = sand.u32 %s226, 1
        %s1521 = smul.addr %s1520, 8
        %s1522 = scalar_lea.vmem [#allocation12], %s1521
        // Predicated region
        $region65: #{tpu_custom_call.1} parent=47 // pred_check
          %p1523 = pneg %p236
        $region66: #{tpu_custom_call.1} parent=47 // pred_check_branch
          %1525 = sbr.rel (%p1523) target = $region68
        $region67: #{tpu_custom_call.1} parent=47 // pred_region
          %s1527 = ssub.s32 128, 128
          %1528 = vsyncadd %s1519, %s1527
          %s1529 = sadd.s32 %s38, %s37
          %s1530 = smul.addr %s1529, 128
          %s1531 = scalar_lea.hbm %s8, %s1530
          %s1533 = sshll.u32 %s1522, 4
          %s1534 = int_to_ptr.vmem [resolvable:$true] %s1533
          %1536 = dma.vmem_to_hbm [thread:$0]  %s1534, 128, %s1531, %s1519
        $region68: #{tpu_custom_call.1} parent=47 // pred_fallthru
          _
      $region48: #{tpu_custom_call.1} parent=5 // pred_fallthru
        _
      %p1537 = scmp.le.s32.totalorder 2, %s28
      // Predicated region
      $region69: #{tpu_custom_call.1} parent=5 // pred_check
        %p1538 = pneg %p1537
      $region70: #{tpu_custom_call.1} parent=5 // pred_check_branch
        %1540 = sbr.rel (%p1538) target = $region72
      $region71: #{tpu_custom_call.1} parent=5 // pred_region
        %s1541 = ssub.s32 %s28, 2
        // Predicated region
        $region73: #{tpu_custom_call.1} parent=71 // pred_check
          %p1542 = pneg %p242
        $region74: #{tpu_custom_call.1} parent=71 // pred_check_branch
          %1544 = sbr.rel (%p1542) target = $region76
        $region75: #{tpu_custom_call.1} parent=71 // pred_region
          %s1545 = sand.u32 %s227, 1
          %s1546 = scalar_lea.sflag [#allocation6], %s1545
          %s1547 = sand.u32 %s227, 1
          %s1548 = smul.addr %s1547, 8
          %s1549 = scalar_lea.vmem [#allocation12], %s1548
          %1550 = dma.done %s1546, 128
        $region76: #{tpu_custom_call.1} parent=71 // pred_fallthru
          _
      $region72: #{tpu_custom_call.1} parent=5 // pred_fallthru
        _
    $region6: #{tpu_custom_call.1} parent=1 // loop_footer
      %s32 = sadd.s32 1, %s28
    $region7: #{tpu_custom_call.1} parent=1 // loop_footer_branch
      %27 = sbr.rel target = $region3
    $region8: #{tpu_custom_call.1} parent=1 // loop_exit
      _
    %1551 = vsyncpa [#allocation5], 1
    %s1552 = scalar_lea.sflag [#allocation5], 1
    %1553 = vsyncpa %s1552, 1
    %1554 = vsyncpa [#allocation8], 1
    %s1555 = scalar_lea.sflag [#allocation8], 1
    %1556 = vsyncpa %s1555, 1
    %1557 = vsyncpa [#allocation11], 1
    %1558 = vsyncpa [#allocation6], 1
    %s1559 = scalar_lea.sflag [#allocation6], 1
    %1560 = vsyncpa %s1559, 1

</llo_original>
